<compile_context>
chip_gen: v5e
topology: v5e:2x2
jax: 0.10.0
libtpu: 0.0.40
codegen_flags: <defaults>
</compile_context>

<pallas_src>
import math
import functools

import jax
import jax.numpy as jnp
from jax import lax
from jax.experimental import pallas as pl
from jax.experimental.pallas import tpu as pltpu


def _hswish(x):
    return x * jnp.clip(x + 3.0, 0.0, 6.0) * (1.0 / 6.0)


# -----------------------------------------------------------------------------
# Fused kernel: norm1 -> kqv -> prm_exp -> linear attention -> proj (+res)
#               -> 1x1 conv/BN/hswish -> dw3x3/BN/hswish -> 1x1 conv/BN (+res)
# Processes Bb batch elements per grid step.
# -----------------------------------------------------------------------------
def fused_kernel(x_ref, g1_ref, b1_ref,
                 wk_ref, wq_ref, wv_ref, bk_ref, bq_ref, bv_ref,
                 w_ref, wp_ref, bp_ref,
                 w1_ref, s1_ref, c1_ref,
                 dw_ref, s2_ref, c2_ref,
                 w3_ref, s3_ref, c3_ref,
                 o_ref, pad_ref,
                 *, Bb, T, dim, emb, m, P, eps):
    n = Bb * T
    C = emb
    bf16 = jnp.bfloat16

    # ---- LayerNorm(dim), eps=1e-5, biased variance (f32) --------------------
    x = x_ref[...].reshape(n, dim)
    mu = jnp.mean(x, axis=-1, keepdims=True)
    var = jnp.mean((x - mu) ** 2, axis=-1, keepdims=True)
    xn = (x - mu) * lax.rsqrt(var + 1e-5) * g1_ref[0] + b1_ref[0]
    xn_bf = xn.astype(bf16)

    # ---- kqv: three separate dots (no lane-unaligned split of a 3*emb slab) -
    k = jnp.dot(xn_bf, wk_ref[...], preferred_element_type=jnp.float32) + bk_ref[0]
    q = jnp.dot(xn_bf, wq_ref[...], preferred_element_type=jnp.float32) + bq_ref[0]
    v = jnp.dot(xn_bf, wv_ref[...], preferred_element_type=jnp.float32) + bv_ref[0]

    # ---- prm_exp: fuse the k and q matmuls (stack along the sublane axis) ---
    kq = jnp.concatenate([k, q], axis=0)                        # (2n, emb) f32
    kqd = 0.5 * jnp.sum(kq * kq, axis=-1, keepdims=True)        # f32
    kqw = jnp.dot(kq.astype(bf16), w_ref[...],
                  preferred_element_type=jnp.float32)           # (2n, m)
    kqp = jnp.exp(kqw - kqd) * (1.0 / math.sqrt(m))             # f32 exp
    kp = kqp[:n].reshape(Bb, T, m)
    qp = kqp[n:].reshape(Bb, T, m)
    vb = v.reshape(Bb, T, C)

    # ---- linear attention: D and y (D kept fully in f32) --------------------
    kp_sum = jnp.sum(kp, axis=1, keepdims=True)                 # (Bb, 1, m)
    D = jnp.sum(qp * kp_sum, axis=-1, keepdims=True)            # (Bb, T, 1)

    kp_bf = kp.astype(bf16)
    qp_bf = qp.astype(bf16)
    v_bf = vb.astype(bf16)
    ys = []
    for b in range(Bb):                     # static unroll, Bb is small (<= 8)
        # kptv[m, c] = sum_t kp[t, m] * v[t, c]  -- contraction over T as
        # trans_a on the MXU, no explicit transpose of the (T, m) array.
        kptv = lax.dot_general(kp_bf[b], v_bf[b],
                               dimension_numbers=(((0,), (0,)), ((), ())),
                               preferred_element_type=jnp.float32)   # (m, C)
        ys.append(jnp.dot(qp_bf[b], kptv.astype(bf16),
                          preferred_element_type=jnp.float32))       # (T, C)
    y = ys[0] if Bb == 1 else jnp.concatenate(ys, axis=0)       # (n, C)
    y = y * pl.reciprocal(D.reshape(n, 1) + eps, approx=True)   # f32 denom

    # ---- proj + residual (dropout = identity in eval mode) ------------------
    proj = jnp.dot(y.astype(bf16), wp_ref[...],
                   preferred_element_type=jnp.float32) + bp_ref[0]
    attn = v + proj                                             # (n, C)

    # ---- LocalityFeedForward (BN folded into scale/bias, eval mode) ---------
    # 1x1 conv + BN + h-swish
    h = jnp.dot(attn.astype(bf16), w1_ref[...],
                preferred_element_type=jnp.float32)
    h = _hswish(h * s1_ref[0] + c1_ref[0])                      # (n, C)

    # depthwise 3x3, stride 1, pad 1 via a padded VMEM scratch (no concats).
    # The full scratch is zeroed each step (borders must be zero; the scratch
    # may be per-core under megacore so we do not rely on program_id == 0).
    pad_ref[...] = jnp.zeros_like(pad_ref)
    pad_ref[:, 1:P + 1, 1:P + 1, :] = h.reshape(Bb, P, P, C)
    acc = jnp.zeros((Bb, P, P, C), jnp.float32)
    for ky in range(3):
        for kx in range(3):
            acc = acc + pad_ref[:, ky:ky + P, kx:kx + P, :] * dw_ref[ky * 3 + kx]
    h2 = _hswish(acc.reshape(n, C) * s2_ref[0] + c2_ref[0])

    # 1x1 conv + BN, residual with the attention output
    h3 = jnp.dot(h2.astype(bf16), w3_ref[...],
                 preferred_element_type=jnp.float32)
    h3 = h3 * s3_ref[0] + c3_ref[0]

    o_ref[...] = (attn + h3).reshape(Bb, T, C)


# -----------------------------------------------------------------------------
# One-time parameter preparation (hoisted out of the per-call path):
# weight transposes, kqv split, BN folding, bf16 casts for MXU operands.
# -----------------------------------------------------------------------------
def prepare_params(params):
    emb = params['wkqv'].shape[0] // 3
    dim = params['wkqv'].shape[1]
    m = params['w'].shape[0]
    bf = jnp.bfloat16

    wkqv_t = jnp.transpose(params['wkqv'])                      # (dim, 3*emb); k,q,v order
    wk, wq, wv = wkqv_t[:, :emb], wkqv_t[:, emb:2 * emb], wkqv_t[:, 2 * emb:]
    bk, bq, bv = jnp.split(params['bkqv'], 3)

    def fold(bn):
        g, b, mean, var = bn
        s = g / jnp.sqrt(var + 1e-5)
        return s, b - mean * s

    s1, c1 = fold(params['bn1'])
    s2, c2 = fold(params['bn2'])
    s3, c3 = fold(params['bn3'])

    return dict(
        dim=dim, emb=emb, m=m,
        g1=params['g1'][None], b1=params['b1'][None],
        wk=wk.astype(bf), wq=wq.astype(bf), wv=wv.astype(bf),
        bk=bk[None], bq=bq[None], bv=bv[None],
        w=jnp.transpose(params['w']).astype(bf),                # (emb, m)
        wproj=jnp.transpose(params['wproj']).astype(bf),        # (emb, emb)
        bproj=params['bproj'][None],
        w1=jnp.transpose(params['conv1_w'][:, :, 0, 0]).astype(bf),   # (Cin, Cout)
        s1=s1[None], c1=c1[None],
        dw=jnp.transpose(params['dw_w'][:, 0, :, :], (1, 2, 0)).reshape(9, emb),  # (9, C)
        s2=s2[None], c2=c2[None],
        w3=jnp.transpose(params['conv3_w'][:, :, 0, 0]).astype(bf),
        s3=s3[None], c3=c3[None],
    )


def _pick_block_b(B, max_bb=8):
    # Largest divisor of B that is <= max_bb while keeping >= 2 grid steps
    # (so v7x's two TensorCores both get work) whenever B >= 2.
    cap = max(1, min(max_bb, B // 2 if B >= 2 else B))
    for bb in range(cap, 0, -1):
        if B % bb == 0:
            return bb
    return 1


# -----------------------------------------------------------------------------
# Wrapper: single fused pallas_call.
# -----------------------------------------------------------------------------
def token_performer_local(x, dev, *, block_b=None):
    B, T, dim = x.shape
    emb, m = dev['emb'], dev['m']
    C = emb
    P = int(math.sqrt(T))
    assert P * P == T, "token count must be a perfect square"
    assert dim == dev['dim']

    Bb = block_b if block_b is not None else _pick_block_b(B)
    assert B % Bb == 0

    kern = functools.partial(fused_kernel, Bb=Bb, T=T, dim=dim, emb=emb, m=m,
                             P=P, eps=1e-8)
    _full = lambda b: (0, 0)

    out = pl.pallas_call(
        kern,
        out_shape=jax.ShapeDtypeStruct((B, T, C), jnp.float32),
        grid=(B // Bb,),
        in_specs=[
            pl.BlockSpec((Bb, T, dim), lambda b: (b, 0, 0)),
            pl.BlockSpec((1, dim), _full), pl.BlockSpec((1, dim), _full),
            pl.BlockSpec((dim, emb), _full), pl.BlockSpec((dim, emb), _full),
            pl.BlockSpec((dim, emb), _full),
            pl.BlockSpec((1, emb), _full), pl.BlockSpec((1, emb), _full),
            pl.BlockSpec((1, emb), _full),
            pl.BlockSpec((emb, m), _full),
            pl.BlockSpec((emb, emb), _full), pl.BlockSpec((1, emb), _full),
            pl.BlockSpec((C, C), _full), pl.BlockSpec((1, C), _full),
            pl.BlockSpec((1, C), _full),
            pl.BlockSpec((9, C), _full), pl.BlockSpec((1, C), _full),
            pl.BlockSpec((1, C), _full),
            pl.BlockSpec((C, C), _full), pl.BlockSpec((1, C), _full),
            pl.BlockSpec((1, C), _full),
        ],
        out_specs=pl.BlockSpec((Bb, T, C), lambda b: (b, 0, 0)),
        scratch_shapes=[pltpu.VMEM((Bb, P + 2, P + 2, C), jnp.float32)],
        compiler_params=pltpu.CompilerParams(
            dimension_semantics=("parallel",),
            vmem_limit_bytes=32 * 1024 * 1024),
    )(x,
      dev['g1'], dev['b1'],
      dev['wk'], dev['wq'], dev['wv'], dev['bk'], dev['bq'], dev['bv'],
      dev['w'], dev['wproj'], dev['bproj'],
      dev['w1'], dev['s1'], dev['c1'],
      dev['dw'], dev['s2'], dev['c2'],
      dev['w3'], dev['s3'], dev['c3'])

    # torch: transpose(1,2).view(B,C,P,P) -> conv -> flatten(2).transpose(1,2)
    # is an identity reshape on this channels-last (B, T, C) result.
    return out


# -----------------------------------------------------------------------------
# Pure-JAX f32 reference (mirrors the PyTorch module in eval mode)
# -----------------------------------------------------------------------------
def ref_forward(x, params):
    emb = params['wkqv'].shape[0] // 3
    m = params['w'].shape[0]

    mu = x.mean(-1, keepdims=True)
    var = ((x - mu) ** 2).mean(-1, keepdims=True)
    xn = (x - mu) / jnp.sqrt(var + 1e-5) * params['g1'] + params['b1']

    kqv = xn @ params['wkqv'].T + params['bkqv']
    k, q, v = jnp.split(kqv, 3, axis=-1)

    def prm_exp(z):
        zd = (z * z).sum(-1, keepdims=True) / 2.0
        wtz = jnp.einsum('bti,mi->btm', z, params['w'])
        return jnp.exp(wtz - zd) / math.sqrt(m)

    kp, qp = prm_exp(k), prm_exp(q)
    D = jnp.einsum('bti,bi->bt', qp, kp.sum(1))[..., None]
    kptv = jnp.einsum('bin,bim->bnm', v, kp)
    y = jnp.einsum('bti,bni->btn', qp, kptv) / (D + 1e-8)
    y = v + (y @ params['wproj'].T + params['bproj'])

    B, T, C = y.shape
    P = int(math.sqrt(T))
    img = jnp.transpose(y, (0, 2, 1)).reshape(B, C, P, P)        # NCHW

    def bn(z, p):
        g, b, mm, vv = p
        return ((z - mm[None, :, None, None]) / jnp.sqrt(vv[None, :, None, None] + 1e-5)
                * g[None, :, None, None] + b[None, :, None, None])

    def hsw(z):
        return z * jnp.clip(z + 3.0, 0.0, 6.0) / 6.0

    h = jnp.einsum('bchw,oc->bohw', img, params['conv1_w'][:, :, 0, 0])
    h = hsw(bn(h, params['bn1']))
    hp = jnp.pad(h, ((0, 0), (0, 0), (1, 1), (1, 1)))
    dw = params['dw_w'][:, 0]                                    # (C, 3, 3)
    acc = jnp.zeros_like(h)
    for ky in range(3):
        for kx in range(3):
            acc = acc + hp[:, :, ky:ky + P, kx:kx + P] * dw[None, :, ky, kx, None, None]
    h = hsw(bn(acc, params['bn2']))
    h = jnp.einsum('bchw,oc->bohw', h, params['conv3_w'][:, :, 0, 0])
    h = bn(h, params['bn3'])
    out = img + h
    return jnp.transpose(out.reshape(B, C, P * P), (0, 2, 1))


# -----------------------------------------------------------------------------
# Deterministic parameter init + driver
# -----------------------------------------------------------------------------
def make_params(key, dim, in_dim, kernel_ratio=0.5):
    emb = in_dim
    m = int(emb * kernel_ratio)
    ks = jax.random.split(key, 24)

    def nrm(k, shape, scale=0.1):
        return scale * jax.random.normal(k, shape, dtype=jnp.float32)

    # orthogonal random-feature matrix w (m, emb), rows orthonormal * sqrt(m)
    a = jax.random.normal(ks[0], (emb, m), dtype=jnp.float32)
    qmat, _ = jnp.linalg.qr(a)                                   # (emb, m), orthonormal cols
    w = qmat.T * math.sqrt(m)                                    # (m, emb)

    def bn_params(k):
        k1, k2, k3, k4 = jax.random.split(k, 4)
        gamma = 1.0 + 0.05 * jax.random.normal(k1, (emb,), dtype=jnp.float32)
        beta = 0.05 * jax.random.normal(k2, (emb,), dtype=jnp.float32)
        mean = 0.05 * jax.random.normal(k3, (emb,), dtype=jnp.float32)
        var = 1.0 + 0.1 * jax.random.uniform(k4, (emb,), dtype=jnp.float32)
        return (gamma, beta, mean, var)

    return dict(
        g1=1.0 + 0.05 * jax.random.normal(ks[1], (dim,), dtype=jnp.float32),
        b1=0.05 * jax.random.normal(ks[2], (dim,), dtype=jnp.float32),
        wkqv=nrm(ks[3], (3 * emb, dim)),
        bkqv=nrm(ks[4], (3 * emb,), 0.01),
        wproj=nrm(ks[5], (emb, emb)),
        bproj=nrm(ks[6], (emb,), 0.01),
        w=w,
        conv1_w=nrm(ks[7], (emb, emb, 1, 1)),
        dw_w=nrm(ks[8], (emb, 1, 3, 3)),
        conv3_w=nrm(ks[9], (emb, emb, 1, 1)),
        bn1=bn_params(ks[10]),
        bn2=bn_params(ks[11]),
        bn3=bn_params(ks[12]),
    )


if __name__ == "__main__":
    B, T, dim, in_dim = 2, 16, 32, 16          # emb = 16, m = 8, patch = 4x4
    key = jax.random.PRNGKey(0)
    kx, kp_ = jax.random.split(key)
    x = jax.random.normal(kx, (B, T, dim), dtype=jnp.float32)
    params = make_params(kp_, dim, in_dim)

    dev = prepare_params(params)               # one-time weight prep (hoisted)
    out = token_performer_local(x, dev)
    out = jax.block_until_ready(out)

    ref = jax.block_until_ready(ref_forward(x, params))
    assert out.shape == (B, T, in_dim)
    assert bool(jnp.all(jnp.isfinite(out)))
    # bf16 MXU operands with f32 accumulation -> slightly looser tolerance than pure f32
    err = float(jnp.max(jnp.abs(out - ref)))
    assert jnp.allclose(out, ref, atol=3e-2, rtol=3e-2), f"max abs err = {err}"

    print("KERNEL_OK")
</pallas_src>

<mosaic_0001>
module attributes {stable_mosaic.version = 11 : i64} {
  func.func @fused_kernel(%arg0: i32, %arg1: memref<1x16x32xf32, #tpu.memory_space<vmem>>, %arg2: memref<1x32xf32, #tpu.memory_space<vmem>>, %arg3: memref<1x32xf32, #tpu.memory_space<vmem>>, %arg4: memref<32x16xbf16, #tpu.memory_space<vmem>>, %arg5: memref<32x16xbf16, #tpu.memory_space<vmem>>, %arg6: memref<32x16xbf16, #tpu.memory_space<vmem>>, %arg7: memref<1x16xf32, #tpu.memory_space<vmem>>, %arg8: memref<1x16xf32, #tpu.memory_space<vmem>>, %arg9: memref<1x16xf32, #tpu.memory_space<vmem>>, %arg10: memref<16x8xbf16, #tpu.memory_space<vmem>>, %arg11: memref<16x16xbf16, #tpu.memory_space<vmem>>, %arg12: memref<1x16xf32, #tpu.memory_space<vmem>>, %arg13: memref<16x16xbf16, #tpu.memory_space<vmem>>, %arg14: memref<1x16xf32, #tpu.memory_space<vmem>>, %arg15: memref<1x16xf32, #tpu.memory_space<vmem>>, %arg16: memref<9x16xf32, #tpu.memory_space<vmem>>, %arg17: memref<1x16xf32, #tpu.memory_space<vmem>>, %arg18: memref<1x16xf32, #tpu.memory_space<vmem>>, %arg19: memref<16x16xbf16, #tpu.memory_space<vmem>>, %arg20: memref<1x16xf32, #tpu.memory_space<vmem>>, %arg21: memref<1x16xf32, #tpu.memory_space<vmem>>, %arg22: memref<1x16x16xf32, #tpu.memory_space<vmem>>, %arg23: memref<1x6x6x16xf32, #tpu.memory_space<vmem>>) attributes {dimension_semantics = [#tpu.dimension_semantics<parallel>], iteration_bounds = array<i64: 2>, scalar_prefetch = 0 : i64, scratch_operands = 1 : i64, tpu.core_type = #tpu.core_type<tc>, window_params = [{transform_indices = @transform_0, window_bounds = array<i64: 1, 16, 32>}, {pipeline_mode = #tpu.pipeline_mode<synchronous>, transform_indices = @transform_1, window_bounds = array<i64: 1, 32>}, {pipeline_mode = #tpu.pipeline_mode<synchronous>, transform_indices = @transform_2, window_bounds = array<i64: 1, 32>}, {pipeline_mode = #tpu.pipeline_mode<synchronous>, transform_indices = @transform_3, window_bounds = array<i64: 32, 16>}, {pipeline_mode = #tpu.pipeline_mode<synchronous>, transform_indices = @transform_4, window_bounds = array<i64: 32, 16>}, {pipeline_mode = #tpu.pipeline_mode<synchronous>, transform_indices = @transform_5, window_bounds = array<i64: 32, 16>}, {pipeline_mode = #tpu.pipeline_mode<synchronous>, transform_indices = @transform_6, window_bounds = array<i64: 1, 16>}, {pipeline_mode = #tpu.pipeline_mode<synchronous>, transform_indices = @transform_7, window_bounds = array<i64: 1, 16>}, {pipeline_mode = #tpu.pipeline_mode<synchronous>, transform_indices = @transform_8, window_bounds = array<i64: 1, 16>}, {pipeline_mode = #tpu.pipeline_mode<synchronous>, transform_indices = @transform_9, window_bounds = array<i64: 16, 8>}, {pipeline_mode = #tpu.pipeline_mode<synchronous>, transform_indices = @transform_10, window_bounds = array<i64: 16, 16>}, {pipeline_mode = #tpu.pipeline_mode<synchronous>, transform_indices = @transform_11, window_bounds = array<i64: 1, 16>}, {pipeline_mode = #tpu.pipeline_mode<synchronous>, transform_indices = @transform_12, window_bounds = array<i64: 16, 16>}, {pipeline_mode = #tpu.pipeline_mode<synchronous>, transform_indices = @transform_13, window_bounds = array<i64: 1, 16>}, {pipeline_mode = #tpu.pipeline_mode<synchronous>, transform_indices = @transform_14, window_bounds = array<i64: 1, 16>}, {pipeline_mode = #tpu.pipeline_mode<synchronous>, transform_indices = @transform_15, window_bounds = array<i64: 9, 16>}, {pipeline_mode = #tpu.pipeline_mode<synchronous>, transform_indices = @transform_16, window_bounds = array<i64: 1, 16>}, {pipeline_mode = #tpu.pipeline_mode<synchronous>, transform_indices = @transform_17, window_bounds = array<i64: 1, 16>}, {pipeline_mode = #tpu.pipeline_mode<synchronous>, transform_indices = @transform_18, window_bounds = array<i64: 16, 16>}, {pipeline_mode = #tpu.pipeline_mode<synchronous>, transform_indices = @transform_19, window_bounds = array<i64: 1, 16>}, {pipeline_mode = #tpu.pipeline_mode<synchronous>, transform_indices = @transform_20, window_bounds = array<i64: 1, 16>}, {transform_indices = @transform_21, window_bounds = array<i64: 1, 16, 16>}]} {
    %c0 = arith.constant 0 : index
    %c0_0 = arith.constant 0 : index
    %c0_1 = arith.constant 0 : index
    %0 = vector.load %arg1[%c0, %c0_0, %c0_1] : memref<1x16x32xf32, #tpu.memory_space<vmem>>, vector<1x16x32xf32>
    %1 = vector.shape_cast %0 : vector<1x16x32xf32> to vector<16x32xf32>
    %cst = arith.constant dense<0.000000e+00> : vector<16xf32>
    %2 = vector.multi_reduction <add>, %1, %cst [1] : vector<16x32xf32> to vector<16xf32>
    %3 = vector.shape_cast %2 : vector<16xf32> to vector<16x1xf32>
    %cst_2 = arith.constant 3.200000e+01 : f32
    %4 = vector.broadcast %cst_2 : f32 to vector<16x1xf32>
    %5 = arith.divf %3, %4 : vector<16x1xf32>
    %6 = vector.broadcast %5 : vector<16x1xf32> to vector<16x32xf32>
    %7 = arith.subf %1, %6 : vector<16x32xf32>
    %8 = arith.mulf %7, %7 : vector<16x32xf32>
    %cst_3 = arith.constant dense<0.000000e+00> : vector<16xf32>
    %9 = vector.multi_reduction <add>, %8, %cst_3 [1] : vector<16x32xf32> to vector<16xf32>
    %10 = vector.shape_cast %9 : vector<16xf32> to vector<16x1xf32>
    %cst_4 = arith.constant 3.200000e+01 : f32
    %11 = vector.broadcast %cst_4 : f32 to vector<16x1xf32>
    %12 = arith.divf %10, %11 : vector<16x1xf32>
    %13 = vector.broadcast %5 : vector<16x1xf32> to vector<16x32xf32>
    %14 = arith.subf %1, %13 : vector<16x32xf32>
    %cst_5 = arith.constant 9.99999974E-6 : f32
    %15 = vector.broadcast %cst_5 : f32 to vector<16x1xf32>
    %16 = arith.addf %12, %15 : vector<16x1xf32>
    %17 = math.rsqrt %16 : vector<16x1xf32>
    %18 = vector.broadcast %17 : vector<16x1xf32> to vector<16x32xf32>
    %19 = arith.mulf %14, %18 : vector<16x32xf32>
    %c0_6 = arith.constant 0 : index
    %c0_7 = arith.constant 0 : index
    %20 = vector.load %arg2[%c0_6, %c0_7] : memref<1x32xf32, #tpu.memory_space<vmem>>, vector<1x32xf32>
    %21 = vector.shape_cast %20 : vector<1x32xf32> to vector<32xf32>
    %22 = vector.shape_cast %21 : vector<32xf32> to vector<1x32xf32>
    %23 = vector.broadcast %22 : vector<1x32xf32> to vector<16x32xf32>
    %24 = arith.mulf %19, %23 : vector<16x32xf32>
    %c0_8 = arith.constant 0 : index
    %c0_9 = arith.constant 0 : index
    %25 = vector.load %arg3[%c0_8, %c0_9] : memref<1x32xf32, #tpu.memory_space<vmem>>, vector<1x32xf32>
    %26 = vector.shape_cast %25 : vector<1x32xf32> to vector<32xf32>
    %27 = vector.shape_cast %26 : vector<32xf32> to vector<1x32xf32>
    %28 = vector.broadcast %27 : vector<1x32xf32> to vector<16x32xf32>
    %29 = arith.addf %24, %28 : vector<16x32xf32>
    %30 = arith.truncf %29 : vector<16x32xf32> to vector<16x32xbf16>
    %c0_10 = arith.constant 0 : index
    %c0_11 = arith.constant 0 : index
    %31 = vector.load %arg4[%c0_10, %c0_11] : memref<32x16xbf16, #tpu.memory_space<vmem>>, vector<32x16xbf16>
    %cst_12 = arith.constant dense<0.000000e+00> : vector<16x16xf32>
    %32 = tpu.matmul %30, %31, %cst_12 {dimension_numbers = #tpu.dot_dimension_numbers<[1], [0], [0], [1], [0, 0, 1, 1], [], []>} : vector<16x32xbf16>, vector<32x16xbf16>, vector<16x16xf32> -> vector<16x16xf32>
    %c0_13 = arith.constant 0 : index
    %c0_14 = arith.constant 0 : index
    %33 = vector.load %arg7[%c0_13, %c0_14] : memref<1x16xf32, #tpu.memory_space<vmem>>, vector<1x16xf32>
    %34 = vector.shape_cast %33 : vector<1x16xf32> to vector<16xf32>
    %35 = vector.shape_cast %34 : vector<16xf32> to vector<1x16xf32>
    %36 = vector.broadcast %35 : vector<1x16xf32> to vector<16x16xf32>
    %37 = arith.addf %32, %36 : vector<16x16xf32>
    %c0_15 = arith.constant 0 : index
    %c0_16 = arith.constant 0 : index
    %38 = vector.load %arg5[%c0_15, %c0_16] : memref<32x16xbf16, #tpu.memory_space<vmem>>, vector<32x16xbf16>
    %cst_17 = arith.constant dense<0.000000e+00> : vector<16x16xf32>
    %39 = tpu.matmul %30, %38, %cst_17 {dimension_numbers = #tpu.dot_dimension_numbers<[1], [0], [0], [1], [0, 0, 1, 1], [], []>} : vector<16x32xbf16>, vector<32x16xbf16>, vector<16x16xf32> -> vector<16x16xf32>
    %c0_18 = arith.constant 0 : index
    %c0_19 = arith.constant 0 : index
    %40 = vector.load %arg8[%c0_18, %c0_19] : memref<1x16xf32, #tpu.memory_space<vmem>>, vector<1x16xf32>
    %41 = vector.shape_cast %40 : vector<1x16xf32> to vector<16xf32>
    %42 = vector.shape_cast %41 : vector<16xf32> to vector<1x16xf32>
    %43 = vector.broadcast %42 : vector<1x16xf32> to vector<16x16xf32>
    %44 = arith.addf %39, %43 : vector<16x16xf32>
    %c0_20 = arith.constant 0 : index
    %c0_21 = arith.constant 0 : index
    %45 = vector.load %arg6[%c0_20, %c0_21] : memref<32x16xbf16, #tpu.memory_space<vmem>>, vector<32x16xbf16>
    %cst_22 = arith.constant dense<0.000000e+00> : vector<16x16xf32>
    %46 = tpu.matmul %30, %45, %cst_22 {dimension_numbers = #tpu.dot_dimension_numbers<[1], [0], [0], [1], [0, 0, 1, 1], [], []>} : vector<16x32xbf16>, vector<32x16xbf16>, vector<16x16xf32> -> vector<16x16xf32>
    %c0_23 = arith.constant 0 : index
    %c0_24 = arith.constant 0 : index
    %47 = vector.load %arg9[%c0_23, %c0_24] : memref<1x16xf32, #tpu.memory_space<vmem>>, vector<1x16xf32>
    %48 = vector.shape_cast %47 : vector<1x16xf32> to vector<16xf32>
    %49 = vector.shape_cast %48 : vector<16xf32> to vector<1x16xf32>
    %50 = vector.broadcast %49 : vector<1x16xf32> to vector<16x16xf32>
    %51 = arith.addf %46, %50 : vector<16x16xf32>
    %52 = tpu.concatenate %37, %44 in 0 : vector<16x16xf32>, vector<16x16xf32> -> vector<32x16xf32>
    %53 = arith.mulf %52, %52 : vector<32x16xf32>
    %cst_25 = arith.constant dense<0.000000e+00> : vector<32xf32>
    %54 = vector.multi_reduction <add>, %53, %cst_25 [1] : vector<32x16xf32> to vector<32xf32>
    %55 = vector.shape_cast %54 : vector<32xf32> to vector<32x1xf32>
    %cst_26 = arith.constant 5.000000e-01 : f32
    %56 = vector.broadcast %cst_26 : f32 to vector<32x1xf32>
    %57 = arith.mulf %56, %55 : vector<32x1xf32>
    %58 = arith.truncf %52 : vector<32x16xf32> to vector<32x16xbf16>
    %c0_27 = arith.constant 0 : index
    %c0_28 = arith.constant 0 : index
    %59 = vector.load %arg10[%c0_27, %c0_28] : memref<16x8xbf16, #tpu.memory_space<vmem>>, vector<16x8xbf16>
    %cst_29 = arith.constant dense<0.000000e+00> : vector<32x8xf32>
    %60 = tpu.matmul %58, %59, %cst_29 {dimension_numbers = #tpu.dot_dimension_numbers<[1], [0], [0], [1], [0, 0, 1, 1], [], []>} : vector<32x16xbf16>, vector<16x8xbf16>, vector<32x8xf32> -> vector<32x8xf32>
    %61 = vector.broadcast %57 : vector<32x1xf32> to vector<32x8xf32>
    %62 = arith.subf %60, %61 : vector<32x8xf32>
    %63 = math.exp %62 : vector<32x8xf32>
    %cst_30 = arith.constant 0.353553385 : f32
    %64 = vector.broadcast %cst_30 : f32 to vector<32x8xf32>
    %65 = arith.mulf %63, %64 : vector<32x8xf32>
    %66 = vector.extract_strided_slice %65 {offsets = [0, 0], sizes = [16, 8], strides = [1, 1]} : vector<32x8xf32> to vector<16x8xf32>
    %67 = vector.shape_cast %66 : vector<16x8xf32> to vector<1x16x8xf32>
    %68 = vector.extract_strided_slice %65 {offsets = [16, 0], sizes = [16, 8], strides = [1, 1]} : vector<32x8xf32> to vector<16x8xf32>
    %69 = vector.shape_cast %68 : vector<16x8xf32> to vector<1x16x8xf32>
    %70 = vector.shape_cast %51 : vector<16x16xf32> to vector<1x16x16xf32>
    %cst_31 = arith.constant dense<0.000000e+00> : vector<1x8xf32>
    %71 = vector.multi_reduction <add>, %67, %cst_31 [1] : vector<1x16x8xf32> to vector<1x8xf32>
    %72 = vector.shape_cast %71 : vector<1x8xf32> to vector<1x1x8xf32>
    %73 = vector.broadcast %72 : vector<1x1x8xf32> to vector<1x16x8xf32>
    %74 = arith.mulf %69, %73 : vector<1x16x8xf32>
    %cst_32 = arith.constant dense<0.000000e+00> : vector<1x16xf32>
    %75 = vector.multi_reduction <add>, %74, %cst_32 [2] : vector<1x16x8xf32> to vector<1x16xf32>
    %76 = vector.shape_cast %75 : vector<1x16xf32> to vector<1x16x1xf32>
    %77 = arith.truncf %67 : vector<1x16x8xf32> to vector<1x16x8xbf16>
    %78 = arith.truncf %69 : vector<1x16x8xf32> to vector<1x16x8xbf16>
    %79 = arith.truncf %70 : vector<1x16x16xf32> to vector<1x16x16xbf16>
    %80 = vector.shape_cast %77 : vector<1x16x8xbf16> to vector<16x8xbf16>
    %81 = vector.shape_cast %79 : vector<1x16x16xbf16> to vector<16x16xbf16>
    %cst_33 = arith.constant dense<0.000000e+00> : vector<8x16xf32>
    %82 = tpu.matmul %80, %81, %cst_33 {dimension_numbers = #tpu.dot_dimension_numbers<[0], [0], [1], [1], [0, 1, 1, 1], [], []>} : vector<16x8xbf16>, vector<16x16xbf16>, vector<8x16xf32> -> vector<8x16xf32>
    %83 = vector.shape_cast %78 : vector<1x16x8xbf16> to vector<16x8xbf16>
    %84 = arith.truncf %82 : vector<8x16xf32> to vector<8x16xbf16>
    %cst_34 = arith.constant dense<0.000000e+00> : vector<16x16xf32>
    %85 = tpu.matmul %83, %84, %cst_34 {dimension_numbers = #tpu.dot_dimension_numbers<[1], [0], [0], [1], [0, 0, 1, 1], [], []>} : vector<16x8xbf16>, vector<8x16xbf16>, vector<16x16xf32> -> vector<16x16xf32>
    %86 = vector.shape_cast %76 : vector<1x16x1xf32> to vector<16x1xf32>
    %cst_35 = arith.constant 9.99999993E-9 : f32
    %87 = vector.broadcast %cst_35 : f32 to vector<16x1xf32>
    %88 = arith.addf %86, %87 : vector<16x1xf32>
    %89 = tpu.reciprocal %88 {approx = true} : vector<16x1xf32> -> vector<16x1xf32>
    %90 = vector.broadcast %89 : vector<16x1xf32> to vector<16x16xf32>
    %91 = arith.mulf %85, %90 : vector<16x16xf32>
    %92 = arith.truncf %91 : vector<16x16xf32> to vector<16x16xbf16>
    %c0_36 = arith.constant 0 : index
    %c0_37 = arith.constant 0 : index
    %93 = vector.load %arg11[%c0_36, %c0_37] : memref<16x16xbf16, #tpu.memory_space<vmem>>, vector<16x16xbf16>
    %cst_38 = arith.constant dense<0.000000e+00> : vector<16x16xf32>
    %94 = tpu.matmul %92, %93, %cst_38 {dimension_numbers = #tpu.dot_dimension_numbers<[1], [0], [0], [1], [0, 0, 1, 1], [], []>} : vector<16x16xbf16>, vector<16x16xbf16>, vector<16x16xf32> -> vector<16x16xf32>
    %c0_39 = arith.constant 0 : index
    %c0_40 = arith.constant 0 : index
    %95 = vector.load %arg12[%c0_39, %c0_40] : memref<1x16xf32, #tpu.memory_space<vmem>>, vector<1x16xf32>
    %96 = vector.shape_cast %95 : vector<1x16xf32> to vector<16xf32>
    %97 = vector.shape_cast %96 : vector<16xf32> to vector<1x16xf32>
    %98 = vector.broadcast %97 : vector<1x16xf32> to vector<16x16xf32>
    %99 = arith.addf %94, %98 : vector<16x16xf32>
    %100 = arith.addf %51, %99 : vector<16x16xf32>
    %101 = arith.truncf %100 : vector<16x16xf32> to vector<16x16xbf16>
    %c0_41 = arith.constant 0 : index
    %c0_42 = arith.constant 0 : index
    %102 = vector.load %arg13[%c0_41, %c0_42] : memref<16x16xbf16, #tpu.memory_space<vmem>>, vector<16x16xbf16>
    %cst_43 = arith.constant dense<0.000000e+00> : vector<16x16xf32>
    %103 = tpu.matmul %101, %102, %cst_43 {dimension_numbers = #tpu.dot_dimension_numbers<[1], [0], [0], [1], [0, 0, 1, 1], [], []>} : vector<16x16xbf16>, vector<16x16xbf16>, vector<16x16xf32> -> vector<16x16xf32>
    %c0_44 = arith.constant 0 : index
    %c0_45 = arith.constant 0 : index
    %104 = vector.load %arg14[%c0_44, %c0_45] : memref<1x16xf32, #tpu.memory_space<vmem>>, vector<1x16xf32>
    %105 = vector.shape_cast %104 : vector<1x16xf32> to vector<16xf32>
    %106 = vector.shape_cast %105 : vector<16xf32> to vector<1x16xf32>
    %107 = vector.broadcast %106 : vector<1x16xf32> to vector<16x16xf32>
    %108 = arith.mulf %103, %107 : vector<16x16xf32>
    %c0_46 = arith.constant 0 : index
    %c0_47 = arith.constant 0 : index
    %109 = vector.load %arg15[%c0_46, %c0_47] : memref<1x16xf32, #tpu.memory_space<vmem>>, vector<1x16xf32>
    %110 = vector.shape_cast %109 : vector<1x16xf32> to vector<16xf32>
    %111 = vector.shape_cast %110 : vector<16xf32> to vector<1x16xf32>
    %112 = vector.broadcast %111 : vector<1x16xf32> to vector<16x16xf32>
    %113 = arith.addf %108, %112 : vector<16x16xf32>
    %cst_48 = arith.constant 3.000000e+00 : f32
    %114 = vector.broadcast %cst_48 : f32 to vector<16x16xf32>
    %115 = arith.addf %113, %114 : vector<16x16xf32>
    %cst_49 = arith.constant 0.000000e+00 : f32
    %cst_50 = arith.constant 6.000000e+00 : f32
    %116 = vector.broadcast %cst_49 : f32 to vector<16x16xf32>
    %117 = arith.maximumf %116, %115 : vector<16x16xf32>
    %118 = vector.broadcast %cst_50 : f32 to vector<16x16xf32>
    %119 = arith.minimumf %118, %117 : vector<16x16xf32>
    %120 = arith.mulf %113, %119 : vector<16x16xf32>
    %cst_51 = arith.constant 0.166666672 : f32
    %121 = vector.broadcast %cst_51 : f32 to vector<16x16xf32>
    %122 = arith.mulf %120, %121 : vector<16x16xf32>
    %cst_52 = arith.constant 0.000000e+00 : f32
    %123 = vector.broadcast %cst_52 : f32 to vector<1x6x6x16xf32>
    %c0_53 = arith.constant 0 : index
    %c0_54 = arith.constant 0 : index
    %c0_55 = arith.constant 0 : index
    %c0_56 = arith.constant 0 : index
    %124 = vector.load %arg23[%c0_53, %c0_54, %c0_55, %c0_56] : memref<1x6x6x16xf32, #tpu.memory_space<vmem>>, vector<1x6x6x16xf32>
    tpu.vector_store %arg23[%c0_53, %c0_54, %c0_55, %c0_56], %123 {strides = array<i32>} : memref<1x6x6x16xf32, #tpu.memory_space<vmem>>, vector<1x6x6x16xf32>,
    %125 = vector.shape_cast %122 : vector<16x16xf32> to vector<1x4x4x16xf32>
    %c0_57 = arith.constant 0 : index
    %c1 = arith.constant 1 : index
    %c1_58 = arith.constant 1 : index
    %c0_59 = arith.constant 0 : index
    %126 = vector.load %arg23[%c0_57, %c1, %c1_58, %c0_59] : memref<1x6x6x16xf32, #tpu.memory_space<vmem>>, vector<1x4x4x16xf32>
    tpu.vector_store %arg23[%c0_57, %c1, %c1_58, %c0_59], %125 {strides = array<i32>} : memref<1x6x6x16xf32, #tpu.memory_space<vmem>>, vector<1x4x4x16xf32>,
    %cst_60 = arith.constant 0.000000e+00 : f32
    %127 = vector.broadcast %cst_60 : f32 to vector<1x4x4x16xf32>
    %c0_61 = arith.constant 0 : index
    %c0_62 = arith.constant 0 : index
    %c0_63 = arith.constant 0 : index
    %c0_64 = arith.constant 0 : index
    %128 = vector.load %arg23[%c0_61, %c0_62, %c0_63, %c0_64] : memref<1x6x6x16xf32, #tpu.memory_space<vmem>>, vector<1x4x4x16xf32>
    %c0_65 = arith.constant 0 : index
    %c0_66 = arith.constant 0 : index
    %129 = vector.load %arg16[%c0_65, %c0_66] : memref<9x16xf32, #tpu.memory_space<vmem>>, vector<1x16xf32>
    %130 = vector.shape_cast %129 : vector<1x16xf32> to vector<16xf32>
    %131 = vector.shape_cast %130 : vector<16xf32> to vector<1x1x1x16xf32>
    %132 = vector.broadcast %131 : vector<1x1x1x16xf32> to vector<1x4x4x16xf32>
    %133 = arith.mulf %128, %132 : vector<1x4x4x16xf32>
    %134 = arith.addf %127, %133 : vector<1x4x4x16xf32>
    %c0_67 = arith.constant 0 : index
    %c0_68 = arith.constant 0 : index
    %c1_69 = arith.constant 1 : index
    %c0_70 = arith.constant 0 : index
    %135 = vector.load %arg23[%c0_67, %c0_68, %c1_69, %c0_70] : memref<1x6x6x16xf32, #tpu.memory_space<vmem>>, vector<1x4x4x16xf32>
    %c1_71 = arith.constant 1 : index
    %c0_72 = arith.constant 0 : index
    %136 = vector.load %arg16[%c1_71, %c0_72] : memref<9x16xf32, #tpu.memory_space<vmem>>, vector<1x16xf32>
    %137 = vector.shape_cast %136 : vector<1x16xf32> to vector<16xf32>
    %138 = vector.shape_cast %137 : vector<16xf32> to vector<1x1x1x16xf32>
    %139 = vector.broadcast %138 : vector<1x1x1x16xf32> to vector<1x4x4x16xf32>
    %140 = arith.mulf %135, %139 : vector<1x4x4x16xf32>
    %141 = arith.addf %134, %140 : vector<1x4x4x16xf32>
    %c0_73 = arith.constant 0 : index
    %c0_74 = arith.constant 0 : index
    %c2 = arith.constant 2 : index
    %c0_75 = arith.constant 0 : index
    %142 = vector.load %arg23[%c0_73, %c0_74, %c2, %c0_75] : memref<1x6x6x16xf32, #tpu.memory_space<vmem>>, vector<1x4x4x16xf32>
    %c2_76 = arith.constant 2 : index
    %c0_77 = arith.constant 0 : index
    %143 = vector.load %arg16[%c2_76, %c0_77] : memref<9x16xf32, #tpu.memory_space<vmem>>, vector<1x16xf32>
    %144 = vector.shape_cast %143 : vector<1x16xf32> to vector<16xf32>
    %145 = vector.shape_cast %144 : vector<16xf32> to vector<1x1x1x16xf32>
    %146 = vector.broadcast %145 : vector<1x1x1x16xf32> to vector<1x4x4x16xf32>
    %147 = arith.mulf %142, %146 : vector<1x4x4x16xf32>
    %148 = arith.addf %141, %147 : vector<1x4x4x16xf32>
    %c0_78 = arith.constant 0 : index
    %c1_79 = arith.constant 1 : index
    %c0_80 = arith.constant 0 : index
    %c0_81 = arith.constant 0 : index
    %149 = vector.load %arg23[%c0_78, %c1_79, %c0_80, %c0_81] : memref<1x6x6x16xf32, #tpu.memory_space<vmem>>, vector<1x4x4x16xf32>
    %c3 = arith.constant 3 : index
    %c0_82 = arith.constant 0 : index
    %150 = vector.load %arg16[%c3, %c0_82] : memref<9x16xf32, #tpu.memory_space<vmem>>, vector<1x16xf32>
    %151 = vector.shape_cast %150 : vector<1x16xf32> to vector<16xf32>
    %152 = vector.shape_cast %151 : vector<16xf32> to vector<1x1x1x16xf32>
    %153 = vector.broadcast %152 : vector<1x1x1x16xf32> to vector<1x4x4x16xf32>
    %154 = arith.mulf %149, %153 : vector<1x4x4x16xf32>
    %155 = arith.addf %148, %154 : vector<1x4x4x16xf32>
    %c0_83 = arith.constant 0 : index
    %c1_84 = arith.constant 1 : index
    %c1_85 = arith.constant 1 : index
    %c0_86 = arith.constant 0 : index
    %156 = vector.load %arg23[%c0_83, %c1_84, %c1_85, %c0_86] : memref<1x6x6x16xf32, #tpu.memory_space<vmem>>, vector<1x4x4x16xf32>
    %c4 = arith.constant 4 : index
    %c0_87 = arith.constant 0 : index
    %157 = vector.load %arg16[%c4, %c0_87] : memref<9x16xf32, #tpu.memory_space<vmem>>, vector<1x16xf32>
    %158 = vector.shape_cast %157 : vector<1x16xf32> to vector<16xf32>
    %159 = vector.shape_cast %158 : vector<16xf32> to vector<1x1x1x16xf32>
    %160 = vector.broadcast %159 : vector<1x1x1x16xf32> to vector<1x4x4x16xf32>
    %161 = arith.mulf %156, %160 : vector<1x4x4x16xf32>
    %162 = arith.addf %155, %161 : vector<1x4x4x16xf32>
    %c0_88 = arith.constant 0 : index
    %c1_89 = arith.constant 1 : index
    %c2_90 = arith.constant 2 : index
    %c0_91 = arith.constant 0 : index
    %163 = vector.load %arg23[%c0_88, %c1_89, %c2_90, %c0_91] : memref<1x6x6x16xf32, #tpu.memory_space<vmem>>, vector<1x4x4x16xf32>
    %c5 = arith.constant 5 : index
    %c0_92 = arith.constant 0 : index
    %164 = vector.load %arg16[%c5, %c0_92] : memref<9x16xf32, #tpu.memory_space<vmem>>, vector<1x16xf32>
    %165 = vector.shape_cast %164 : vector<1x16xf32> to vector<16xf32>
    %166 = vector.shape_cast %165 : vector<16xf32> to vector<1x1x1x16xf32>
    %167 = vector.broadcast %166 : vector<1x1x1x16xf32> to vector<1x4x4x16xf32>
    %168 = arith.mulf %163, %167 : vector<1x4x4x16xf32>
    %169 = arith.addf %162, %168 : vector<1x4x4x16xf32>
    %c0_93 = arith.constant 0 : index
    %c2_94 = arith.constant 2 : index
    %c0_95 = arith.constant 0 : index
    %c0_96 = arith.constant 0 : index
    %170 = vector.load %arg23[%c0_93, %c2_94, %c0_95, %c0_96] : memref<1x6x6x16xf32, #tpu.memory_space<vmem>>, vector<1x4x4x16xf32>
    %c6 = arith.constant 6 : index
    %c0_97 = arith.constant 0 : index
    %171 = vector.load %arg16[%c6, %c0_97] : memref<9x16xf32, #tpu.memory_space<vmem>>, vector<1x16xf32>
    %172 = vector.shape_cast %171 : vector<1x16xf32> to vector<16xf32>
    %173 = vector.shape_cast %172 : vector<16xf32> to vector<1x1x1x16xf32>
    %174 = vector.broadcast %173 : vector<1x1x1x16xf32> to vector<1x4x4x16xf32>
    %175 = arith.mulf %170, %174 : vector<1x4x4x16xf32>
    %176 = arith.addf %169, %175 : vector<1x4x4x16xf32>
    %c0_98 = arith.constant 0 : index
    %c2_99 = arith.constant 2 : index
    %c1_100 = arith.constant 1 : index
    %c0_101 = arith.constant 0 : index
    %177 = vector.load %arg23[%c0_98, %c2_99, %c1_100, %c0_101] : memref<1x6x6x16xf32, #tpu.memory_space<vmem>>, vector<1x4x4x16xf32>
    %c7 = arith.constant 7 : index
    %c0_102 = arith.constant 0 : index
    %178 = vector.load %arg16[%c7, %c0_102] : memref<9x16xf32, #tpu.memory_space<vmem>>, vector<1x16xf32>
    %179 = vector.shape_cast %178 : vector<1x16xf32> to vector<16xf32>
    %180 = vector.shape_cast %179 : vector<16xf32> to vector<1x1x1x16xf32>
    %181 = vector.broadcast %180 : vector<1x1x1x16xf32> to vector<1x4x4x16xf32>
    %182 = arith.mulf %177, %181 : vector<1x4x4x16xf32>
    %183 = arith.addf %176, %182 : vector<1x4x4x16xf32>
    %c0_103 = arith.constant 0 : index
    %c2_104 = arith.constant 2 : index
    %c2_105 = arith.constant 2 : index
    %c0_106 = arith.constant 0 : index
    %184 = vector.load %arg23[%c0_103, %c2_104, %c2_105, %c0_106] : memref<1x6x6x16xf32, #tpu.memory_space<vmem>>, vector<1x4x4x16xf32>
    %c8 = arith.constant 8 : index
    %c0_107 = arith.constant 0 : index
    %185 = vector.load %arg16[%c8, %c0_107] : memref<9x16xf32, #tpu.memory_space<vmem>>, vector<1x16xf32>
    %186 = vector.shape_cast %185 : vector<1x16xf32> to vector<16xf32>
    %187 = vector.shape_cast %186 : vector<16xf32> to vector<1x1x1x16xf32>
    %188 = vector.broadcast %187 : vector<1x1x1x16xf32> to vector<1x4x4x16xf32>
    %189 = arith.mulf %184, %188 : vector<1x4x4x16xf32>
    %190 = arith.addf %183, %189 : vector<1x4x4x16xf32>
    %191 = vector.shape_cast %190 : vector<1x4x4x16xf32> to vector<16x16xf32>
    %c0_108 = arith.constant 0 : index
    %c0_109 = arith.constant 0 : index
    %192 = vector.load %arg17[%c0_108, %c0_109] : memref<1x16xf32, #tpu.memory_space<vmem>>, vector<1x16xf32>
    %193 = vector.shape_cast %192 : vector<1x16xf32> to vector<16xf32>
    %194 = vector.shape_cast %193 : vector<16xf32> to vector<1x16xf32>
    %195 = vector.broadcast %194 : vector<1x16xf32> to vector<16x16xf32>
    %196 = arith.mulf %191, %195 : vector<16x16xf32>
    %c0_110 = arith.constant 0 : index
    %c0_111 = arith.constant 0 : index
    %197 = vector.load %arg18[%c0_110, %c0_111] : memref<1x16xf32, #tpu.memory_space<vmem>>, vector<1x16xf32>
    %198 = vector.shape_cast %197 : vector<1x16xf32> to vector<16xf32>
    %199 = vector.shape_cast %198 : vector<16xf32> to vector<1x16xf32>
    %200 = vector.broadcast %199 : vector<1x16xf32> to vector<16x16xf32>
    %201 = arith.addf %196, %200 : vector<16x16xf32>
    %cst_112 = arith.constant 3.000000e+00 : f32
    %202 = vector.broadcast %cst_112 : f32 to vector<16x16xf32>
    %203 = arith.addf %201, %202 : vector<16x16xf32>
    %cst_113 = arith.constant 0.000000e+00 : f32
    %cst_114 = arith.constant 6.000000e+00 : f32
    %204 = vector.broadcast %cst_113 : f32 to vector<16x16xf32>
    %205 = arith.maximumf %204, %203 : vector<16x16xf32>
    %206 = vector.broadcast %cst_114 : f32 to vector<16x16xf32>
    %207 = arith.minimumf %206, %205 : vector<16x16xf32>
    %208 = arith.mulf %201, %207 : vector<16x16xf32>
    %cst_115 = arith.constant 0.166666672 : f32
    %209 = vector.broadcast %cst_115 : f32 to vector<16x16xf32>
    %210 = arith.mulf %208, %209 : vector<16x16xf32>
    %211 = arith.truncf %210 : vector<16x16xf32> to vector<16x16xbf16>
    %c0_116 = arith.constant 0 : index
    %c0_117 = arith.constant 0 : index
    %212 = vector.load %arg19[%c0_116, %c0_117] : memref<16x16xbf16, #tpu.memory_space<vmem>>, vector<16x16xbf16>
    %cst_118 = arith.constant dense<0.000000e+00> : vector<16x16xf32>
    %213 = tpu.matmul %211, %212, %cst_118 {dimension_numbers = #tpu.dot_dimension_numbers<[1], [0], [0], [1], [0, 0, 1, 1], [], []>} : vector<16x16xbf16>, vector<16x16xbf16>, vector<16x16xf32> -> vector<16x16xf32>
    %c0_119 = arith.constant 0 : index
    %c0_120 = arith.constant 0 : index
    %214 = vector.load %arg20[%c0_119, %c0_120] : memref<1x16xf32, #tpu.memory_space<vmem>>, vector<1x16xf32>
    %215 = vector.shape_cast %214 : vector<1x16xf32> to vector<16xf32>
    %216 = vector.shape_cast %215 : vector<16xf32> to vector<1x16xf32>
    %217 = vector.broadcast %216 : vector<1x16xf32> to vector<16x16xf32>
    %218 = arith.mulf %213, %217 : vector<16x16xf32>
    %c0_121 = arith.constant 0 : index
    %c0_122 = arith.constant 0 : index
    %219 = vector.load %arg21[%c0_121, %c0_122] : memref<1x16xf32, #tpu.memory_space<vmem>>, vector<1x16xf32>
    %220 = vector.shape_cast %219 : vector<1x16xf32> to vector<16xf32>
    %221 = vector.shape_cast %220 : vector<16xf32> to vector<1x16xf32>
    %222 = vector.broadcast %221 : vector<1x16xf32> to vector<16x16xf32>
    %223 = arith.addf %218, %222 : vector<16x16xf32>
    %224 = arith.addf %100, %223 : vector<16x16xf32>
    %225 = vector.shape_cast %224 : vector<16x16xf32> to vector<1x16x16xf32>
    %c0_123 = arith.constant 0 : index
    %c0_124 = arith.constant 0 : index
    %c0_125 = arith.constant 0 : index
    %226 = vector.load %arg22[%c0_123, %c0_124, %c0_125] : memref<1x16x16xf32, #tpu.memory_space<vmem>>, vector<1x16x16xf32>
    tpu.vector_store %arg22[%c0_123, %c0_124, %c0_125], %225 {strides = array<i32>} : memref<1x16x16xf32, #tpu.memory_space<vmem>>, vector<1x16x16xf32>,
    return
  }
  func.func @transform_0(%arg0: i32) -> (i32, i32, i32) {
    %c0_i32 = arith.constant 0 : i32
    %c0_i32_0 = arith.constant 0 : i32
    %c0_i32_1 = arith.constant 0 : i32
    return %arg0, %c0_i32, %c0_i32_0 : i32, i32, i32
  }
  func.func @transform_1(%arg0: i32) -> (i32, i32) {
    %c0_i32 = arith.constant 0 : i32
    %c0_i32_0 = arith.constant 0 : i32
    %c0_i32_1 = arith.constant 0 : i32
    return %c0_i32, %c0_i32_0 : i32, i32
  }
  func.func @transform_2(%arg0: i32) -> (i32, i32) {
    %c0_i32 = arith.constant 0 : i32
    %c0_i32_0 = arith.constant 0 : i32
    %c0_i32_1 = arith.constant 0 : i32
    return %c0_i32, %c0_i32_0 : i32, i32
  }
  func.func @transform_3(%arg0: i32) -> (i32, i32) {
    %c0_i32 = arith.constant 0 : i32
    %c0_i32_0 = arith.constant 0 : i32
    %c0_i32_1 = arith.constant 0 : i32
    return %c0_i32, %c0_i32_0 : i32, i32
  }
  func.func @transform_4(%arg0: i32) -> (i32, i32) {
    %c0_i32 = arith.constant 0 : i32
    %c0_i32_0 = arith.constant 0 : i32
    %c0_i32_1 = arith.constant 0 : i32
    return %c0_i32, %c0_i32_0 : i32, i32
  }
  func.func @transform_5(%arg0: i32) -> (i32, i32) {
    %c0_i32 = arith.constant 0 : i32
    %c0_i32_0 = arith.constant 0 : i32
    %c0_i32_1 = arith.constant 0 : i32
    return %c0_i32, %c0_i32_0 : i32, i32
  }
  func.func @transform_6(%arg0: i32) -> (i32, i32) {
    %c0_i32 = arith.constant 0 : i32
    %c0_i32_0 = arith.constant 0 : i32
    %c0_i32_1 = arith.constant 0 : i32
    return %c0_i32, %c0_i32_0 : i32, i32
  }
  func.func @transform_7(%arg0: i32) -> (i32, i32) {
    %c0_i32 = arith.constant 0 : i32
    %c0_i32_0 = arith.constant 0 : i32
    %c0_i32_1 = arith.constant 0 : i32
    return %c0_i32, %c0_i32_0 : i32, i32
  }
  func.func @transform_8(%arg0: i32) -> (i32, i32) {
    %c0_i32 = arith.constant 0 : i32
    %c0_i32_0 = arith.constant 0 : i32
    %c0_i32_1 = arith.constant 0 : i32
    return %c0_i32, %c0_i32_0 : i32, i32
  }
  func.func @transform_9(%arg0: i32) -> (i32, i32) {
    %c0_i32 = arith.constant 0 : i32
    %c0_i32_0 = arith.constant 0 : i32
    %c0_i32_1 = arith.constant 0 : i32
    return %c0_i32, %c0_i32_0 : i32, i32
  }
  func.func @transform_10(%arg0: i32) -> (i32, i32) {
    %c0_i32 = arith.constant 0 : i32
    %c0_i32_0 = arith.constant 0 : i32
    %c0_i32_1 = arith.constant 0 : i32
    return %c0_i32, %c0_i32_0 : i32, i32
  }
  func.func @transform_11(%arg0: i32) -> (i32, i32) {
    %c0_i32 = arith.constant 0 : i32
    %c0_i32_0 = arith.constant 0 : i32
    %c0_i32_1 = arith.constant 0 : i32
    return %c0_i32, %c0_i32_0 : i32, i32
  }
  func.func @transform_12(%arg0: i32) -> (i32, i32) {
    %c0_i32 = arith.constant 0 : i32
    %c0_i32_0 = arith.constant 0 : i32
    %c0_i32_1 = arith.constant 0 : i32
    return %c0_i32, %c0_i32_0 : i32, i32
  }
  func.func @transform_13(%arg0: i32) -> (i32, i32) {
    %c0_i32 = arith.constant 0 : i32
    %c0_i32_0 = arith.constant 0 : i32
    %c0_i32_1 = arith.constant 0 : i32
    return %c0_i32, %c0_i32_0 : i32, i32
  }
  func.func @transform_14(%arg0: i32) -> (i32, i32) {
    %c0_i32 = arith.constant 0 : i32
    %c0_i32_0 = arith.constant 0 : i32
    %c0_i32_1 = arith.constant 0 : i32
    return %c0_i32, %c0_i32_0 : i32, i32
  }
  func.func @transform_15(%arg0: i32) -> (i32, i32) {
    %c0_i32 = arith.constant 0 : i32
    %c0_i32_0 = arith.constant 0 : i32
    %c0_i32_1 = arith.constant 0 : i32
    return %c0_i32, %c0_i32_0 : i32, i32
  }
  func.func @transform_16(%arg0: i32) -> (i32, i32) {
    %c0_i32 = arith.constant 0 : i32
    %c0_i32_0 = arith.constant 0 : i32
    %c0_i32_1 = arith.constant 0 : i32
    return %c0_i32, %c0_i32_0 : i32, i32
  }
  func.func @transform_17(%arg0: i32) -> (i32, i32) {
    %c0_i32 = arith.constant 0 : i32
    %c0_i32_0 = arith.constant 0 : i32
    %c0_i32_1 = arith.constant 0 : i32
    return %c0_i32, %c0_i32_0 : i32, i32
  }
  func.func @transform_18(%arg0: i32) -> (i32, i32) {
    %c0_i32 = arith.constant 0 : i32
    %c0_i32_0 = arith.constant 0 : i32
    %c0_i32_1 = arith.constant 0 : i32
    return %c0_i32, %c0_i32_0 : i32, i32
  }
  func.func @transform_19(%arg0: i32) -> (i32, i32) {
    %c0_i32 = arith.constant 0 : i32
    %c0_i32_0 = arith.constant 0 : i32
    %c0_i32_1 = arith.constant 0 : i32
    return %c0_i32, %c0_i32_0 : i32, i32
  }
  func.func @transform_20(%arg0: i32) -> (i32, i32) {
    %c0_i32 = arith.constant 0 : i32
    %c0_i32_0 = arith.constant 0 : i32
    %c0_i32_1 = arith.constant 0 : i32
    return %c0_i32, %c0_i32_0 : i32, i32
  }
  func.func @transform_21(%arg0: i32) -> (i32, i32, i32) {
    %c0_i32 = arith.constant 0 : i32
    %c0_i32_0 = arith.constant 0 : i32
    %c0_i32_1 = arith.constant 0 : i32
    return %arg0, %c0_i32, %c0_i32_0 : i32, i32, i32
  }
}

</mosaic_0001>

<llo_original>
// kernel: tpu_custom_call.1
$region0: #{tpu_custom_call.1}
  #allocation0 [shape = 'u32[]', space=smem, size = 0x4, offset = 0x4, fixed_abs, tag = 'smem constant byte address 0x4 - core index']
  #allocation1 [shape = 'u32[72,128]{1,0:T(1,128)}', space=vmem, size = 0x9000, scoped, tag = 'internal scratch']
  #allocation2 [shape = 'f32[1,6,6,16]{3,2,1,0:T(8,128)}', space=vmem, size = 0x6000, scoped, tag = 'scratch operand']
  %s0 = inlined_call_operand.vmem [shape: f32[2,16,32], index: 0, kind: input, shape index: {}]
  %s1 = inlined_call_operand.vmem [shape: f32[1,32], index: 1, kind: input, shape index: {}]
  %s2 = inlined_call_operand.vmem [shape: f32[1,32], index: 2, kind: input, shape index: {}]
  %s3 = inlined_call_operand.vmem [shape: bf16[32,16], index: 3, kind: input, shape index: {}]
  %s4 = inlined_call_operand.vmem [shape: bf16[32,16], index: 4, kind: input, shape index: {}]
  %s5 = inlined_call_operand.vmem [shape: bf16[32,16], index: 5, kind: input, shape index: {}]
  %s6 = inlined_call_operand.vmem [shape: f32[1,16], index: 6, kind: input, shape index: {}]
  %s7 = inlined_call_operand.vmem [shape: f32[1,16], index: 7, kind: input, shape index: {}]
  %s8 = inlined_call_operand.vmem [shape: f32[1,16], index: 8, kind: input, shape index: {}]
  %s9 = inlined_call_operand.vmem [shape: bf16[16,8], index: 9, kind: input, shape index: {}]
  %s10 = inlined_call_operand.vmem [shape: bf16[16,16], index: 10, kind: input, shape index: {}]
  %s11 = inlined_call_operand.hbm [shape: f32[1,16], index: 11, kind: input, shape index: {}]
  %s12 = inlined_call_operand.hbm [shape: bf16[16,16], index: 12, kind: input, shape index: {}]
  %s13 = inlined_call_operand.hbm [shape: f32[1,16], index: 13, kind: input, shape index: {}]
  %s14 = inlined_call_operand.hbm [shape: f32[1,16], index: 14, kind: input, shape index: {}]
  %s15 = inlined_call_operand.vmem [shape: f32[9,16], index: 15, kind: input, shape index: {}]
  %s16 = inlined_call_operand.vmem [shape: f32[1,16], index: 16, kind: input, shape index: {}]
  %s17 = inlined_call_operand.vmem [shape: f32[1,16], index: 17, kind: input, shape index: {}]
  %s18 = inlined_call_operand.vmem [shape: bf16[16,16], index: 18, kind: input, shape index: {}]
  %s19 = inlined_call_operand.vmem [shape: f32[1,16], index: 19, kind: input, shape index: {}]
  %s20 = inlined_call_operand.vmem [shape: f32[1,16], index: 20, kind: input, shape index: {}]
  %s21 = inlined_call_operand.hbm [shape: f32[2,16,16], index: 21, kind: output, shape index: {}]
  %s22 = sld [smem:[#allocation0]]
  $region133: #{tpu_custom_call.1} parent=0
    _
  %s24 = ssub.s32 1, %s22
  %s25 = scalar_select 0, %s24, %s22
  $region1: #{tpu_custom_call.1} parent=0
    #allocation3 [shape = 'u8[512]{0}', space=vmem, size = 0x400, scoped, tag = 'input window, operand 11, single buffered']
    #allocation4 [shape = 's32[2]{0}', space=sflag, size = 0x8, scoped, tag = 'scoped memory for tpu_custom_call.1']
    #allocation5 [shape = 's32[2]{0}', space=sflag, size = 0x8, scoped, tag = 'scoped memory for tpu_custom_call.1']
    #allocation6 [shape = 'u8[4096]{0}', space=vmem, size = 0x1000, scoped, tag = 'input window, operand 12, single buffered']
    #allocation7 [shape = 's32[1]{0}', space=sflag, size = 0x4, scoped, tag = 'scoped memory for tpu_custom_call.1']
    #allocation8 [shape = 'u8[512]{0}', space=vmem, size = 0x400, scoped, tag = 'input window, operand 13, single buffered']
    #allocation9 [shape = 'u8[512]{0}', space=vmem, size = 0x400, scoped, tag = 'input window, operand 14, single buffered']
    #allocation10 [shape = 's32[1]{0}', space=sflag, size = 0x4, scoped, tag = 'scoped memory for tpu_custom_call.1']
    #allocation11 [shape = 'u8[16384]{0}', space=vmem, size = 0x4000, scoped, tag = 'output window, operand 0']
    %26 = vsyncpa [#allocation4], 0
    %27 = vsyncpa [#allocation7], 0
    %28 = vsyncpa [#allocation10], 0
    %29 = vsyncpa [#allocation5], 0
    %s30 = scalar_lea.sflag [#allocation5], 1
    %31 = vsyncpa %s30, 0
    loop: start=0, step=1, limit=4
    $region2: #{tpu_custom_call.1} parent=1 // loop_pre_header
      _
    $region3: #{tpu_custom_call.1} parent=1 // loop_header
      %s33 = sphi 0, %s37
      %p34 = scmp.ge.s32.totalorder %s33, 4
      %s43 = sphi 0, %s45
      %s46 = sphi 0, %s43
      %s47 = sphi 0, %s46
      %s63 = sphi 0, %s47
      %s67 = sphi 0, %s67
      %s69 = sphi 0, %s67
      %s70 = sphi 0, %s69
      %s84 = sphi 0, %s70
      %s88 = sphi 0, %s88
      %s90 = sphi 0, %s88
      %s91 = sphi 0, %s90
      %s105 = sphi 0, %s91
      %s109 = sphi 0, %s109
      %s111 = sphi 0, %s109
      %s112 = sphi 0, %s111
      %s126 = sphi 0, %s112
      %s130 = sphi 0, %s130
      %s132 = sphi 0, %s130
      %s133 = sphi 0, %s132
      %s147 = sphi 0, %s133
      %s151 = sphi 0, %s151
      %s153 = sphi 0, %s151
      %s154 = sphi 0, %s153
      %s168 = sphi 0, %s154
      %s172 = sphi 0, %s172
      %s174 = sphi 0, %s172
      %s175 = sphi 0, %s174
      %s189 = sphi 0, %s175
      %s193 = sphi 0, %s193
      %s195 = sphi 0, %s193
      %s196 = sphi 0, %s195
      %s210 = sphi 0, %s196
      %s214 = sphi 0, %s214
      %s216 = sphi 0, %s214
      %s217 = sphi 0, %s216
      %s231 = sphi 0, %s217
      %s235 = sphi 0, %s235
      %s237 = sphi 0, %s235
      %s238 = sphi 0, %s237
      %s252 = sphi 0, %s238
      %s256 = sphi 0, %s256
      %s258 = sphi 0, %s256
      %s259 = sphi 0, %s258
      %s273 = sphi 0, %s259
      %s277 = sphi 0, %s277
      %s279 = sphi 0, %s277
      %s280 = sphi 0, %s279
      %s294 = sphi 0, %s280
      %s298 = sphi 0, %s298
      %s300 = sphi 0, %s298
      %s301 = sphi 0, %s300
      %s315 = sphi 0, %s301
      %s319 = sphi 0, %s319
      %s321 = sphi 0, %s319
      %s322 = sphi 0, %s321
      %s336 = sphi 0, %s322
      %s340 = sphi 0, %s340
      %s342 = sphi 0, %s340
      %s343 = sphi 0, %s342
      %s357 = sphi 0, %s343
      %s361 = sphi 0, %s361
      %s363 = sphi 0, %s361
      %s364 = sphi 0, %s363
      %s378 = sphi 0, %s364
      %s382 = sphi 0, %s382
      %s384 = sphi 0, %s382
      %s385 = sphi 0, %s384
      %s399 = sphi 0, %s385
      %s403 = sphi 0, %s403
      %s405 = sphi 0, %s403
      %s406 = sphi 0, %s405
      %s420 = sphi 0, %s406
      %s424 = sphi 0, %s424
      %s426 = sphi 0, %s424
      %s427 = sphi 0, %s426
      %s441 = sphi 0, %s427
      %s445 = sphi 0, %s445
      %s447 = sphi 0, %s445
      %s448 = sphi 0, %s447
      %s462 = sphi 0, %s448
      %s466 = sphi 0, %s466
      %s468 = sphi 0, %s466
      %s469 = sphi 0, %s468
      %s483 = sphi 0, %s469
      %s489 = sphi 0, %s491
      %s492 = sphi 0, %s489
      %s493 = sphi 0, %s492
      %s509 = sphi 0, %s493
    $region4: #{tpu_custom_call.1} parent=1 // loop_header_branch
      %36 = sbr.rel (%p34) target = $region8
    $region5: #{tpu_custom_call.1} parent=1 // loop_body
      %s38 = ssub.s32 %s33, 1
      %s39 = ssub.s32 %s33, 2
      %s40 = sadd.s32 %s33, 1
      %s41 = ssub.s32 %s33, %s40
      %p42 = scmp.eq.s32.totalorder %s41, 0
      %s44 = sadd.s32 %s43, 1
      %s45 = scalar_select %p42, %s43, %s44
      %p48 = pneg %p42
      %p49 = scmp.eq.s32.totalorder %s33, 1
      %p50 = por %p48, %p49
      %p51 = scmp.ne.s32.totalorder %s43, %s46
      %p52 = scmp.eq.s32.totalorder %s33, 0
      %p53 = por %p51, %p52
      %p54 = scmp.ne.s32.totalorder %s43, %s46
      %p55 = scmp.eq.s32.totalorder %s38, 1
      %p56 = por %p54, %p55
      %p57 = scmp.ne.s32.totalorder %s46, %s47
      %p58 = scmp.eq.s32.totalorder %s38, 0
      %p59 = por %p57, %p58
      %p60 = scmp.ne.s32.totalorder %s46, %s47
      %p61 = scmp.eq.s32.totalorder %s39, 1
      %p62 = por %p60, %p61
      %p64 = scmp.ne.s32.totalorder %s47, %s63
      %p65 = scmp.eq.s32.totalorder %s39, 0
      %p66 = por %p64, %p65
      %s68 = sadd.s32 %s67, 1
      %p71 = scmp.eq.s32.totalorder %s33, 1
      %p72 = scmp.ne.s32.totalorder %s67, %s69
      %p73 = scmp.eq.s32.totalorder %s33, 0
      %p74 = por %p72, %p73
      %p75 = scmp.ne.s32.totalorder %s67, %s69
      %p76 = scmp.eq.s32.totalorder %s38, 1
      %p77 = por %p75, %p76
      %p78 = scmp.ne.s32.totalorder %s69, %s70
      %p79 = scmp.eq.s32.totalorder %s38, 0
      %p80 = por %p78, %p79
      %p81 = scmp.ne.s32.totalorder %s69, %s70
      %p82 = scmp.eq.s32.totalorder %s39, 1
      %p83 = por %p81, %p82
      %p85 = scmp.ne.s32.totalorder %s70, %s84
      %p86 = scmp.eq.s32.totalorder %s39, 0
      %p87 = por %p85, %p86
      %s89 = sadd.s32 %s88, 1
      %p92 = scmp.eq.s32.totalorder %s33, 1
      %p93 = scmp.ne.s32.totalorder %s88, %s90
      %p94 = scmp.eq.s32.totalorder %s33, 0
      %p95 = por %p93, %p94
      %p96 = scmp.ne.s32.totalorder %s88, %s90
      %p97 = scmp.eq.s32.totalorder %s38, 1
      %p98 = por %p96, %p97
      %p99 = scmp.ne.s32.totalorder %s90, %s91
      %p100 = scmp.eq.s32.totalorder %s38, 0
      %p101 = por %p99, %p100
      %p102 = scmp.ne.s32.totalorder %s90, %s91
      %p103 = scmp.eq.s32.totalorder %s39, 1
      %p104 = por %p102, %p103
      %p106 = scmp.ne.s32.totalorder %s91, %s105
      %p107 = scmp.eq.s32.totalorder %s39, 0
      %p108 = por %p106, %p107
      %s110 = sadd.s32 %s109, 1
      %p113 = scmp.eq.s32.totalorder %s33, 1
      %p114 = scmp.ne.s32.totalorder %s109, %s111
      %p115 = scmp.eq.s32.totalorder %s33, 0
      %p116 = por %p114, %p115
      %p117 = scmp.ne.s32.totalorder %s109, %s111
      %p118 = scmp.eq.s32.totalorder %s38, 1
      %p119 = por %p117, %p118
      %p120 = scmp.ne.s32.totalorder %s111, %s112
      %p121 = scmp.eq.s32.totalorder %s38, 0
      %p122 = por %p120, %p121
      %p123 = scmp.ne.s32.totalorder %s111, %s112
      %p124 = scmp.eq.s32.totalorder %s39, 1
      %p125 = por %p123, %p124
      %p127 = scmp.ne.s32.totalorder %s112, %s126
      %p128 = scmp.eq.s32.totalorder %s39, 0
      %p129 = por %p127, %p128
      %s131 = sadd.s32 %s130, 1
      %p134 = scmp.eq.s32.totalorder %s33, 1
      %p135 = scmp.ne.s32.totalorder %s130, %s132
      %p136 = scmp.eq.s32.totalorder %s33, 0
      %p137 = por %p135, %p136
      %p138 = scmp.ne.s32.totalorder %s130, %s132
      %p139 = scmp.eq.s32.totalorder %s38, 1
      %p140 = por %p138, %p139
      %p141 = scmp.ne.s32.totalorder %s132, %s133
      %p142 = scmp.eq.s32.totalorder %s38, 0
      %p143 = por %p141, %p142
      %p144 = scmp.ne.s32.totalorder %s132, %s133
      %p145 = scmp.eq.s32.totalorder %s39, 1
      %p146 = por %p144, %p145
      %p148 = scmp.ne.s32.totalorder %s133, %s147
      %p149 = scmp.eq.s32.totalorder %s39, 0
      %p150 = por %p148, %p149
      %s152 = sadd.s32 %s151, 1
      %p155 = scmp.eq.s32.totalorder %s33, 1
      %p156 = scmp.ne.s32.totalorder %s151, %s153
      %p157 = scmp.eq.s32.totalorder %s33, 0
      %p158 = por %p156, %p157
      %p159 = scmp.ne.s32.totalorder %s151, %s153
      %p160 = scmp.eq.s32.totalorder %s38, 1
      %p161 = por %p159, %p160
      %p162 = scmp.ne.s32.totalorder %s153, %s154
      %p163 = scmp.eq.s32.totalorder %s38, 0
      %p164 = por %p162, %p163
      %p165 = scmp.ne.s32.totalorder %s153, %s154
      %p166 = scmp.eq.s32.totalorder %s39, 1
      %p167 = por %p165, %p166
      %p169 = scmp.ne.s32.totalorder %s154, %s168
      %p170 = scmp.eq.s32.totalorder %s39, 0
      %p171 = por %p169, %p170
      %s173 = sadd.s32 %s172, 1
      %p176 = scmp.eq.s32.totalorder %s33, 1
      %p177 = scmp.ne.s32.totalorder %s172, %s174
      %p178 = scmp.eq.s32.totalorder %s33, 0
      %p179 = por %p177, %p178
      %p180 = scmp.ne.s32.totalorder %s172, %s174
      %p181 = scmp.eq.s32.totalorder %s38, 1
      %p182 = por %p180, %p181
      %p183 = scmp.ne.s32.totalorder %s174, %s175
      %p184 = scmp.eq.s32.totalorder %s38, 0
      %p185 = por %p183, %p184
      %p186 = scmp.ne.s32.totalorder %s174, %s175
      %p187 = scmp.eq.s32.totalorder %s39, 1
      %p188 = por %p186, %p187
      %p190 = scmp.ne.s32.totalorder %s175, %s189
      %p191 = scmp.eq.s32.totalorder %s39, 0
      %p192 = por %p190, %p191
      %s194 = sadd.s32 %s193, 1
      %p197 = scmp.eq.s32.totalorder %s33, 1
      %p198 = scmp.ne.s32.totalorder %s193, %s195
      %p199 = scmp.eq.s32.totalorder %s33, 0
      %p200 = por %p198, %p199
      %p201 = scmp.ne.s32.totalorder %s193, %s195
      %p202 = scmp.eq.s32.totalorder %s38, 1
      %p203 = por %p201, %p202
      %p204 = scmp.ne.s32.totalorder %s195, %s196
      %p205 = scmp.eq.s32.totalorder %s38, 0
      %p206 = por %p204, %p205
      %p207 = scmp.ne.s32.totalorder %s195, %s196
      %p208 = scmp.eq.s32.totalorder %s39, 1
      %p209 = por %p207, %p208
      %p211 = scmp.ne.s32.totalorder %s196, %s210
      %p212 = scmp.eq.s32.totalorder %s39, 0
      %p213 = por %p211, %p212
      %s215 = sadd.s32 %s214, 1
      %p218 = scmp.eq.s32.totalorder %s33, 1
      %p219 = scmp.ne.s32.totalorder %s214, %s216
      %p220 = scmp.eq.s32.totalorder %s33, 0
      %p221 = por %p219, %p220
      %p222 = scmp.ne.s32.totalorder %s214, %s216
      %p223 = scmp.eq.s32.totalorder %s38, 1
      %p224 = por %p222, %p223
      %p225 = scmp.ne.s32.totalorder %s216, %s217
      %p226 = scmp.eq.s32.totalorder %s38, 0
      %p227 = por %p225, %p226
      %p228 = scmp.ne.s32.totalorder %s216, %s217
      %p229 = scmp.eq.s32.totalorder %s39, 1
      %p230 = por %p228, %p229
      %p232 = scmp.ne.s32.totalorder %s217, %s231
      %p233 = scmp.eq.s32.totalorder %s39, 0
      %p234 = por %p232, %p233
      %s236 = sadd.s32 %s235, 1
      %p239 = scmp.eq.s32.totalorder %s33, 1
      %p240 = scmp.ne.s32.totalorder %s235, %s237
      %p241 = scmp.eq.s32.totalorder %s33, 0
      %p242 = por %p240, %p241
      %p243 = scmp.ne.s32.totalorder %s235, %s237
      %p244 = scmp.eq.s32.totalorder %s38, 1
      %p245 = por %p243, %p244
      %p246 = scmp.ne.s32.totalorder %s237, %s238
      %p247 = scmp.eq.s32.totalorder %s38, 0
      %p248 = por %p246, %p247
      %p249 = scmp.ne.s32.totalorder %s237, %s238
      %p250 = scmp.eq.s32.totalorder %s39, 1
      %p251 = por %p249, %p250
      %p253 = scmp.ne.s32.totalorder %s238, %s252
      %p254 = scmp.eq.s32.totalorder %s39, 0
      %p255 = por %p253, %p254
      %s257 = sadd.s32 %s256, 1
      %p260 = scmp.eq.s32.totalorder %s33, 1
      %p261 = scmp.ne.s32.totalorder %s256, %s258
      %p262 = scmp.eq.s32.totalorder %s33, 0
      %p263 = por %p261, %p262
      %p264 = scmp.ne.s32.totalorder %s256, %s258
      %p265 = scmp.eq.s32.totalorder %s38, 1
      %p266 = por %p264, %p265
      %p267 = scmp.ne.s32.totalorder %s258, %s259
      %p268 = scmp.eq.s32.totalorder %s38, 0
      %p269 = por %p267, %p268
      %p270 = scmp.ne.s32.totalorder %s258, %s259
      %p271 = scmp.eq.s32.totalorder %s39, 1
      %p272 = por %p270, %p271
      %p274 = scmp.ne.s32.totalorder %s259, %s273
      %p275 = scmp.eq.s32.totalorder %s39, 0
      %p276 = por %p274, %p275
      %s278 = sadd.s32 %s277, 1
      %p281 = scmp.eq.s32.totalorder %s33, 1
      %p282 = scmp.ne.s32.totalorder %s277, %s279
      %p283 = scmp.eq.s32.totalorder %s33, 0
      %p284 = por %p282, %p283
      %p285 = scmp.ne.s32.totalorder %s277, %s279
      %p286 = scmp.eq.s32.totalorder %s38, 1
      %p287 = por %p285, %p286
      %p288 = scmp.ne.s32.totalorder %s279, %s280
      %p289 = scmp.eq.s32.totalorder %s38, 0
      %p290 = por %p288, %p289
      %p291 = scmp.ne.s32.totalorder %s279, %s280
      %p292 = scmp.eq.s32.totalorder %s39, 1
      %p293 = por %p291, %p292
      %p295 = scmp.ne.s32.totalorder %s280, %s294
      %p296 = scmp.eq.s32.totalorder %s39, 0
      %p297 = por %p295, %p296
      %s299 = sadd.s32 %s298, 1
      %p302 = scmp.eq.s32.totalorder %s33, 1
      %p303 = scmp.ne.s32.totalorder %s298, %s300
      %p304 = scmp.eq.s32.totalorder %s33, 0
      %p305 = por %p303, %p304
      %p306 = scmp.ne.s32.totalorder %s298, %s300
      %p307 = scmp.eq.s32.totalorder %s38, 1
      %p308 = por %p306, %p307
      %p309 = scmp.ne.s32.totalorder %s300, %s301
      %p310 = scmp.eq.s32.totalorder %s38, 0
      %p311 = por %p309, %p310
      %p312 = scmp.ne.s32.totalorder %s300, %s301
      %p313 = scmp.eq.s32.totalorder %s39, 1
      %p314 = por %p312, %p313
      %p316 = scmp.ne.s32.totalorder %s301, %s315
      %p317 = scmp.eq.s32.totalorder %s39, 0
      %p318 = por %p316, %p317
      %s320 = sadd.s32 %s319, 1
      %p323 = scmp.eq.s32.totalorder %s33, 1
      %p324 = scmp.ne.s32.totalorder %s319, %s321
      %p325 = scmp.eq.s32.totalorder %s33, 0
      %p326 = por %p324, %p325
      %p327 = scmp.ne.s32.totalorder %s319, %s321
      %p328 = scmp.eq.s32.totalorder %s38, 1
      %p329 = por %p327, %p328
      %p330 = scmp.ne.s32.totalorder %s321, %s322
      %p331 = scmp.eq.s32.totalorder %s38, 0
      %p332 = por %p330, %p331
      %p333 = scmp.ne.s32.totalorder %s321, %s322
      %p334 = scmp.eq.s32.totalorder %s39, 1
      %p335 = por %p333, %p334
      %p337 = scmp.ne.s32.totalorder %s322, %s336
      %p338 = scmp.eq.s32.totalorder %s39, 0
      %p339 = por %p337, %p338
      %s341 = sadd.s32 %s340, 1
      %p344 = scmp.eq.s32.totalorder %s33, 1
      %p345 = scmp.ne.s32.totalorder %s340, %s342
      %p346 = scmp.eq.s32.totalorder %s33, 0
      %p347 = por %p345, %p346
      %p348 = scmp.ne.s32.totalorder %s340, %s342
      %p349 = scmp.eq.s32.totalorder %s38, 1
      %p350 = por %p348, %p349
      %p351 = scmp.ne.s32.totalorder %s342, %s343
      %p352 = scmp.eq.s32.totalorder %s38, 0
      %p353 = por %p351, %p352
      %p354 = scmp.ne.s32.totalorder %s342, %s343
      %p355 = scmp.eq.s32.totalorder %s39, 1
      %p356 = por %p354, %p355
      %p358 = scmp.ne.s32.totalorder %s343, %s357
      %p359 = scmp.eq.s32.totalorder %s39, 0
      %p360 = por %p358, %p359
      %s362 = sadd.s32 %s361, 1
      %p365 = scmp.eq.s32.totalorder %s33, 1
      %p366 = scmp.ne.s32.totalorder %s361, %s363
      %p367 = scmp.eq.s32.totalorder %s33, 0
      %p368 = por %p366, %p367
      %p369 = scmp.ne.s32.totalorder %s361, %s363
      %p370 = scmp.eq.s32.totalorder %s38, 1
      %p371 = por %p369, %p370
      %p372 = scmp.ne.s32.totalorder %s363, %s364
      %p373 = scmp.eq.s32.totalorder %s38, 0
      %p374 = por %p372, %p373
      %p375 = scmp.ne.s32.totalorder %s363, %s364
      %p376 = scmp.eq.s32.totalorder %s39, 1
      %p377 = por %p375, %p376
      %p379 = scmp.ne.s32.totalorder %s364, %s378
      %p380 = scmp.eq.s32.totalorder %s39, 0
      %p381 = por %p379, %p380
      %s383 = sadd.s32 %s382, 1
      %p386 = scmp.eq.s32.totalorder %s33, 1
      %p387 = scmp.ne.s32.totalorder %s382, %s384
      %p388 = scmp.eq.s32.totalorder %s33, 0
      %p389 = por %p387, %p388
      %p390 = scmp.ne.s32.totalorder %s382, %s384
      %p391 = scmp.eq.s32.totalorder %s38, 1
      %p392 = por %p390, %p391
      %p393 = scmp.ne.s32.totalorder %s384, %s385
      %p394 = scmp.eq.s32.totalorder %s38, 0
      %p395 = por %p393, %p394
      %p396 = scmp.ne.s32.totalorder %s384, %s385
      %p397 = scmp.eq.s32.totalorder %s39, 1
      %p398 = por %p396, %p397
      %p400 = scmp.ne.s32.totalorder %s385, %s399
      %p401 = scmp.eq.s32.totalorder %s39, 0
      %p402 = por %p400, %p401
      %s404 = sadd.s32 %s403, 1
      %p407 = scmp.eq.s32.totalorder %s33, 1
      %p408 = scmp.ne.s32.totalorder %s403, %s405
      %p409 = scmp.eq.s32.totalorder %s33, 0
      %p410 = por %p408, %p409
      %p411 = scmp.ne.s32.totalorder %s403, %s405
      %p412 = scmp.eq.s32.totalorder %s38, 1
      %p413 = por %p411, %p412
      %p414 = scmp.ne.s32.totalorder %s405, %s406
      %p415 = scmp.eq.s32.totalorder %s38, 0
      %p416 = por %p414, %p415
      %p417 = scmp.ne.s32.totalorder %s405, %s406
      %p418 = scmp.eq.s32.totalorder %s39, 1
      %p419 = por %p417, %p418
      %p421 = scmp.ne.s32.totalorder %s406, %s420
      %p422 = scmp.eq.s32.totalorder %s39, 0
      %p423 = por %p421, %p422
      %s425 = sadd.s32 %s424, 1
      %p428 = scmp.eq.s32.totalorder %s33, 1
      %p429 = scmp.ne.s32.totalorder %s424, %s426
      %p430 = scmp.eq.s32.totalorder %s33, 0
      %p431 = por %p429, %p430
      %p432 = scmp.ne.s32.totalorder %s424, %s426
      %p433 = scmp.eq.s32.totalorder %s38, 1
      %p434 = por %p432, %p433
      %p435 = scmp.ne.s32.totalorder %s426, %s427
      %p436 = scmp.eq.s32.totalorder %s38, 0
      %p437 = por %p435, %p436
      %p438 = scmp.ne.s32.totalorder %s426, %s427
      %p439 = scmp.eq.s32.totalorder %s39, 1
      %p440 = por %p438, %p439
      %p442 = scmp.ne.s32.totalorder %s427, %s441
      %p443 = scmp.eq.s32.totalorder %s39, 0
      %p444 = por %p442, %p443
      %s446 = sadd.s32 %s445, 1
      %p449 = scmp.eq.s32.totalorder %s33, 1
      %p450 = scmp.ne.s32.totalorder %s445, %s447
      %p451 = scmp.eq.s32.totalorder %s33, 0
      %p452 = por %p450, %p451
      %p453 = scmp.ne.s32.totalorder %s445, %s447
      %p454 = scmp.eq.s32.totalorder %s38, 1
      %p455 = por %p453, %p454
      %p456 = scmp.ne.s32.totalorder %s447, %s448
      %p457 = scmp.eq.s32.totalorder %s38, 0
      %p458 = por %p456, %p457
      %p459 = scmp.ne.s32.totalorder %s447, %s448
      %p460 = scmp.eq.s32.totalorder %s39, 1
      %p461 = por %p459, %p460
      %p463 = scmp.ne.s32.totalorder %s448, %s462
      %p464 = scmp.eq.s32.totalorder %s39, 0
      %p465 = por %p463, %p464
      %s467 = sadd.s32 %s466, 1
      %p470 = scmp.eq.s32.totalorder %s33, 1
      %p471 = scmp.ne.s32.totalorder %s466, %s468
      %p472 = scmp.eq.s32.totalorder %s33, 0
      %p473 = por %p471, %p472
      %p474 = scmp.ne.s32.totalorder %s466, %s468
      %p475 = scmp.eq.s32.totalorder %s38, 1
      %p476 = por %p474, %p475
      %p477 = scmp.ne.s32.totalorder %s468, %s469
      %p478 = scmp.eq.s32.totalorder %s38, 0
      %p479 = por %p477, %p478
      %p480 = scmp.ne.s32.totalorder %s468, %s469
      %p481 = scmp.eq.s32.totalorder %s39, 1
      %p482 = por %p480, %p481
      %p484 = scmp.ne.s32.totalorder %s469, %s483
      %p485 = scmp.eq.s32.totalorder %s39, 0
      %p486 = por %p484, %p485
      %s487 = ssub.s32 %s33, %s40
      %p488 = scmp.eq.s32.totalorder %s487, 0
      %s490 = sadd.s32 %s489, 1
      %s491 = scalar_select %p488, %s489, %s490
      %p494 = pneg %p488
      %p495 = scmp.eq.s32.totalorder %s33, 1
      %p496 = por %p494, %p495
      %p497 = scmp.ne.s32.totalorder %s489, %s492
      %p498 = scmp.eq.s32.totalorder %s33, 0
      %p499 = por %p497, %p498
      %p500 = scmp.ne.s32.totalorder %s489, %s492
      %p501 = scmp.eq.s32.totalorder %s38, 1
      %p502 = por %p500, %p501
      %p503 = scmp.ne.s32.totalorder %s492, %s493
      %p504 = scmp.eq.s32.totalorder %s38, 0
      %p505 = por %p503, %p504
      %p506 = scmp.ne.s32.totalorder %s492, %s493
      %p507 = scmp.eq.s32.totalorder %s39, 1
      %p508 = por %p506, %p507
      %p510 = scmp.ne.s32.totalorder %s493, %s509
      %p511 = scmp.eq.s32.totalorder %s39, 0
      %p512 = por %p510, %p511
      %p513 = scmp.le.s32.totalorder 1, %s33
      %p514 = scmp.lt.s32.totalorder %s33, 3
      %p515 = pnand %p513, %p514
      %p516 = pneg %p515
      // Predicated region
      $region9: #{tpu_custom_call.1} parent=5 // pred_check
        _
      $region10: #{tpu_custom_call.1} parent=5 // pred_check_branch
        %518 = sbr.rel (%p515) target = $region12
      $region11: #{tpu_custom_call.1} parent=5 // pred_region
        %s519 = ssub.s32 %s33, 1
        // Predicated region
        $region13: #{tpu_custom_call.1} parent=11 // pred_check
          %p520 = pneg %p80
        $region14: #{tpu_custom_call.1} parent=11 // pred_check_branch
          %522 = sbr.rel (%p520) target = $region16
        $region15: #{tpu_custom_call.1} parent=11 // pred_region
          _
        $region16: #{tpu_custom_call.1} parent=11 // pred_fallthru
          _
        // Predicated region
        $region17: #{tpu_custom_call.1} parent=11 // pred_check
          %p523 = pneg %p101
        $region18: #{tpu_custom_call.1} parent=11 // pred_check_branch
          %525 = sbr.rel (%p523) target = $region20
        $region19: #{tpu_custom_call.1} parent=11 // pred_region
          _
        $region20: #{tpu_custom_call.1} parent=11 // pred_fallthru
          _
        // Predicated region
        $region21: #{tpu_custom_call.1} parent=11 // pred_check
          %p526 = pneg %p122
        $region22: #{tpu_custom_call.1} parent=11 // pred_check_branch
          %528 = sbr.rel (%p526) target = $region24
        $region23: #{tpu_custom_call.1} parent=11 // pred_region
          _
        $region24: #{tpu_custom_call.1} parent=11 // pred_fallthru
          _
        // Predicated region
        $region25: #{tpu_custom_call.1} parent=11 // pred_check
          %p529 = pneg %p143
        $region26: #{tpu_custom_call.1} parent=11 // pred_check_branch
          %531 = sbr.rel (%p529) target = $region28
        $region27: #{tpu_custom_call.1} parent=11 // pred_region
          _
        $region28: #{tpu_custom_call.1} parent=11 // pred_fallthru
          _
        // Predicated region
        $region29: #{tpu_custom_call.1} parent=11 // pred_check
          %p532 = pneg %p164
        $region30: #{tpu_custom_call.1} parent=11 // pred_check_branch
          %534 = sbr.rel (%p532) target = $region32
        $region31: #{tpu_custom_call.1} parent=11 // pred_region
          _
        $region32: #{tpu_custom_call.1} parent=11 // pred_fallthru
          _
        // Predicated region
        $region33: #{tpu_custom_call.1} parent=11 // pred_check
          %p535 = pneg %p185
        $region34: #{tpu_custom_call.1} parent=11 // pred_check_branch
          %537 = sbr.rel (%p535) target = $region36
        $region35: #{tpu_custom_call.1} parent=11 // pred_region
          _
        $region36: #{tpu_custom_call.1} parent=11 // pred_fallthru
          _
        // Predicated region
        $region37: #{tpu_custom_call.1} parent=11 // pred_check
          %p538 = pneg %p206
        $region38: #{tpu_custom_call.1} parent=11 // pred_check_branch
          %540 = sbr.rel (%p538) target = $region40
        $region39: #{tpu_custom_call.1} parent=11 // pred_region
          _
        $region40: #{tpu_custom_call.1} parent=11 // pred_fallthru
          _
        // Predicated region
        $region41: #{tpu_custom_call.1} parent=11 // pred_check
          %p541 = pneg %p227
        $region42: #{tpu_custom_call.1} parent=11 // pred_check_branch
          %543 = sbr.rel (%p541) target = $region44
        $region43: #{tpu_custom_call.1} parent=11 // pred_region
          _
        $region44: #{tpu_custom_call.1} parent=11 // pred_fallthru
          _
        // Predicated region
        $region45: #{tpu_custom_call.1} parent=11 // pred_check
          %p544 = pneg %p248
        $region46: #{tpu_custom_call.1} parent=11 // pred_check_branch
          %546 = sbr.rel (%p544) target = $region48
        $region47: #{tpu_custom_call.1} parent=11 // pred_region
          _
        $region48: #{tpu_custom_call.1} parent=11 // pred_fallthru
          _
        // Predicated region
        $region49: #{tpu_custom_call.1} parent=11 // pred_check
          %p547 = pneg %p269
        $region50: #{tpu_custom_call.1} parent=11 // pred_check_branch
          %549 = sbr.rel (%p547) target = $region52
        $region51: #{tpu_custom_call.1} parent=11 // pred_region
          _
        $region52: #{tpu_custom_call.1} parent=11 // pred_fallthru
          _
        // Predicated region
        $region53: #{tpu_custom_call.1} parent=11 // pred_check
          %p550 = pneg %p290
        $region54: #{tpu_custom_call.1} parent=11 // pred_check_branch
          %552 = sbr.rel (%p550) target = $region56
        $region55: #{tpu_custom_call.1} parent=11 // pred_region
          %554 = vsyncadd [#allocation4], 0
          %s556 = sshll.u32 %s11, 4
          %s557 = int_to_ptr.hbm [resolvable:$true] %s556
          %s558 = sshll.u32 [#allocation3], 4
          %s559 = int_to_ptr.vmem [resolvable:$true] %s558
          %561 = dma.hbm_to_vmem [thread:$0]  %s557, 16, %s559, [#allocation4]
        $region56: #{tpu_custom_call.1} parent=11 // pred_fallthru
          _
        // Predicated region
        $region57: #{tpu_custom_call.1} parent=11 // pred_check
          %p562 = pneg %p311
        $region58: #{tpu_custom_call.1} parent=11 // pred_check_branch
          %564 = sbr.rel (%p562) target = $region60
        $region59: #{tpu_custom_call.1} parent=11 // pred_region
          %566 = vsyncadd [#allocation7], 0
          %s567 = sshll.u32 %s12, 4
          %s568 = int_to_ptr.hbm [resolvable:$true] %s567
          %s569 = sshll.u32 [#allocation6], 4
          %s570 = int_to_ptr.vmem [resolvable:$true] %s569
          %575 = dma.hbm_to_vmem [thread:$0]  %s568, 128, %s570, [#allocation7], 64, 64, 4
        $region60: #{tpu_custom_call.1} parent=11 // pred_fallthru
          _
        // Predicated region
        $region61: #{tpu_custom_call.1} parent=11 // pred_check
          %p576 = pneg %p332
        $region62: #{tpu_custom_call.1} parent=11 // pred_check_branch
          %578 = sbr.rel (%p576) target = $region64
        $region63: #{tpu_custom_call.1} parent=11 // pred_region
          %580 = vsyncadd [#allocation7], 0
          %s582 = sshll.u32 %s13, 4
          %s583 = int_to_ptr.hbm [resolvable:$true] %s582
          %s584 = sshll.u32 [#allocation8], 4
          %s585 = int_to_ptr.vmem [resolvable:$true] %s584
          %587 = dma.hbm_to_vmem [thread:$0]  %s583, 16, %s585, [#allocation7]
        $region64: #{tpu_custom_call.1} parent=11 // pred_fallthru
          _
        // Predicated region
        $region65: #{tpu_custom_call.1} parent=11 // pred_check
          %p588 = pneg %p353
        $region66: #{tpu_custom_call.1} parent=11 // pred_check_branch
          %590 = sbr.rel (%p588) target = $region68
        $region67: #{tpu_custom_call.1} parent=11 // pred_region
          %592 = vsyncadd [#allocation10], 0
          %s594 = sshll.u32 %s14, 4
          %s595 = int_to_ptr.hbm [resolvable:$true] %s594
          %s596 = sshll.u32 [#allocation9], 4
          %s597 = int_to_ptr.vmem [resolvable:$true] %s596
          %599 = dma.hbm_to_vmem [thread:$0]  %s595, 16, %s597, [#allocation10]
        $region68: #{tpu_custom_call.1} parent=11 // pred_fallthru
          _
        // Predicated region
        $region69: #{tpu_custom_call.1} parent=11 // pred_check
          %p600 = pneg %p374
        $region70: #{tpu_custom_call.1} parent=11 // pred_check_branch
          %602 = sbr.rel (%p600) target = $region72
        $region71: #{tpu_custom_call.1} parent=11 // pred_region
          _
        $region72: #{tpu_custom_call.1} parent=11 // pred_fallthru
          _
        // Predicated region
        $region73: #{tpu_custom_call.1} parent=11 // pred_check
          %p603 = pneg %p395
        $region74: #{tpu_custom_call.1} parent=11 // pred_check_branch
          %605 = sbr.rel (%p603) target = $region76
        $region75: #{tpu_custom_call.1} parent=11 // pred_region
          _
        $region76: #{tpu_custom_call.1} parent=11 // pred_fallthru
          _
        // Predicated region
        $region77: #{tpu_custom_call.1} parent=11 // pred_check
          %p606 = pneg %p416
        $region78: #{tpu_custom_call.1} parent=11 // pred_check_branch
          %608 = sbr.rel (%p606) target = $region80
        $region79: #{tpu_custom_call.1} parent=11 // pred_region
          _
        $region80: #{tpu_custom_call.1} parent=11 // pred_fallthru
          _
        // Predicated region
        $region81: #{tpu_custom_call.1} parent=11 // pred_check
          %p609 = pneg %p437
        $region82: #{tpu_custom_call.1} parent=11 // pred_check_branch
          %611 = sbr.rel (%p609) target = $region84
        $region83: #{tpu_custom_call.1} parent=11 // pred_region
          _
        $region84: #{tpu_custom_call.1} parent=11 // pred_fallthru
          _
        // Predicated region
        $region85: #{tpu_custom_call.1} parent=11 // pred_check
          %p612 = pneg %p458
        $region86: #{tpu_custom_call.1} parent=11 // pred_check_branch
          %614 = sbr.rel (%p612) target = $region88
        $region87: #{tpu_custom_call.1} parent=11 // pred_region
          _
        $region88: #{tpu_custom_call.1} parent=11 // pred_fallthru
          _
        // Predicated region
        $region89: #{tpu_custom_call.1} parent=11 // pred_check
          %p615 = pneg %p479
        $region90: #{tpu_custom_call.1} parent=11 // pred_check_branch
          %617 = sbr.rel (%p615) target = $region92
        $region91: #{tpu_custom_call.1} parent=11 // pred_region
          _
        $region92: #{tpu_custom_call.1} parent=11 // pred_fallthru
          _
      $region12: #{tpu_custom_call.1} parent=5 // pred_fallthru
        _
      %p618 = scmp.lt.s32.totalorder %s33, 2
      // Predicated region
      $region93: #{tpu_custom_call.1} parent=5 // pred_check
        %p619 = pneg %p618
      $region94: #{tpu_custom_call.1} parent=5 // pred_check_branch
        %621 = sbr.rel (%p619) target = $region96
      $region95: #{tpu_custom_call.1} parent=5 // pred_region
        // Predicated region
        $region97: #{tpu_custom_call.1} parent=95 // pred_check
          %p622 = pneg %p53
        $region98: #{tpu_custom_call.1} parent=95 // pred_check_branch
          %624 = sbr.rel (%p622) target = $region100
        $region99: #{tpu_custom_call.1} parent=95 // pred_region
          %p625 = scmp.lt.s32.totalorder %s33, 1
          %s626 = scalar_select %p625, %s33, 1
          %s627 = smul.addr %s626, 2
          %s628 = smul.addr %s627, 8
          %s629 = scalar_lea.vmem %s0, %s628
        $region100: #{tpu_custom_call.1} parent=95 // pred_fallthru
          _
      $region96: #{tpu_custom_call.1} parent=5 // pred_fallthru
        _
      %p630 = scmp.le.s32.totalorder 1, %s33
      %p631 = scmp.lt.s32.totalorder %s33, 3
      %p632 = pnand %p630, %p631
      %p633 = pneg %p632
      // Predicated region
      $region101: #{tpu_custom_call.1} parent=5 // pred_check
        _
      $region102: #{tpu_custom_call.1} parent=5 // pred_check_branch
        %635 = sbr.rel (%p632) target = $region104
      $region103: #{tpu_custom_call.1} parent=5 // pred_region
        %s636 = ssub.s32 %s33, 1
        // Predicated region
        $region105: #{tpu_custom_call.1} parent=103 // pred_check
          %p637 = pneg %p290
        $region106: #{tpu_custom_call.1} parent=103 // pred_check_branch
          %639 = sbr.rel (%p637) target = $region108
        $region107: #{tpu_custom_call.1} parent=103 // pred_region
          %641 = dma.done [#allocation4], 16
        $region108: #{tpu_custom_call.1} parent=103 // pred_fallthru
          _
        // Predicated region
        $region109: #{tpu_custom_call.1} parent=103 // pred_check
          %p642 = pneg %p311
        $region110: #{tpu_custom_call.1} parent=103 // pred_check_branch
          %644 = sbr.rel (%p642) target = $region112
        $region111: #{tpu_custom_call.1} parent=103 // pred_region
          %646 = dma.done [#allocation7], 128
        $region112: #{tpu_custom_call.1} parent=103 // pred_fallthru
          _
        // Predicated region
        $region113: #{tpu_custom_call.1} parent=103 // pred_check
          %p647 = pneg %p332
        $region114: #{tpu_custom_call.1} parent=103 // pred_check_branch
          %649 = sbr.rel (%p647) target = $region116
        $region115: #{tpu_custom_call.1} parent=103 // pred_region
          %651 = dma.done [#allocation7], 16
        $region116: #{tpu_custom_call.1} parent=103 // pred_fallthru
          _
        // Predicated region
        $region117: #{tpu_custom_call.1} parent=103 // pred_check
          %p652 = pneg %p353
        $region118: #{tpu_custom_call.1} parent=103 // pred_check_branch
          %654 = sbr.rel (%p652) target = $region120
        $region119: #{tpu_custom_call.1} parent=103 // pred_region
          %656 = dma.done [#allocation10], 16
        $region120: #{tpu_custom_call.1} parent=103 // pred_fallthru
          _
        %p657 = scmp.lt.s32.totalorder %s38, 1
        %s658 = scalar_select %p657, %s38, 1
        %s659 = smul.addr %s658, 2
        %s660 = smul.addr %s659, 8
        %s661 = scalar_lea.vmem %s0, %s660
        %p662 = pneg %p59
        %p663 = pneg %p56
        %p664 = pneg %p80
        %p665 = pneg %p77
        %p666 = pneg %p101
        %p667 = pneg %p98
        %p668 = pneg %p122
        %p669 = pneg %p119
        %p670 = pneg %p143
        %p671 = pneg %p140
        %p672 = pneg %p164
        %p673 = pneg %p161
        %p674 = pneg %p185
        %p675 = pneg %p182
        %p676 = pneg %p206
        %p677 = pneg %p203
        %p678 = pneg %p227
        %p679 = pneg %p224
        %p680 = pneg %p248
        %p681 = pneg %p245
        %p682 = pneg %p269
        %p683 = pneg %p266
        %p684 = pneg %p290
        %p685 = pneg %p287
        %p686 = pneg %p311
        %p687 = pneg %p308
        %p688 = pneg %p332
        %p689 = pneg %p329
        %p690 = pneg %p353
        %p691 = pneg %p350
        %p692 = pneg %p374
        %p693 = pneg %p371
        %p694 = pneg %p395
        %p695 = pneg %p392
        %p696 = pneg %p416
        %p697 = pneg %p413
        %p698 = pneg %p437
        %p699 = pneg %p434
        %p700 = pneg %p458
        %p701 = pneg %p455
        %p702 = pneg %p479
        %p703 = pneg %p476
        %p704 = pneg %p505
        %p705 = pneg %p502
        %s706 = sand.u32 %s492, 1
        %s707 = scalar_lea.sflag [#allocation5], %s706
        %s708 = sand.u32 %s492, 1
        %s709 = smul.addr %s708, 16
        %s710 = scalar_lea.vmem [#allocation11], %s709
        %p711 = scmp.lt.s32.totalorder %s38, 1
        %s712 = scalar_select %p711, %s38, 1
        %s713 = smul.addr %s712, 2
        %s714 = smul.addr %s713, 8
        %s715 = scalar_lea.vmem %s0, %s714
        %v717 = vld [vmem:[%s715] sm:$0xff]
        %v718 = vld [vmem:[%s715 + $0x8] sm:$0xff]
        %vm719 = vcmask 261120
        %v720 = vsel %vm719, %v717, 0.0
        %721 = vadd.xlane.f32.xlu0 %v720
        %v722 = vpop.xlane.xlu0 %721
        %v723 = vsel %vm719, %v718, 0.0
        %724 = vadd.xlane.f32.xlu0 %v723
        %v725 = vpop.xlane.xlu0 %724
        %v726 = vrcp.pop 32.0
        %v727 = vmul.f32 32.0, %v726
        %v728 = vsub.f32 1.0, %v727
        %v729 = vmul.f32 %v726, %v728
        %v730 = vadd.f32 %v726, %v729
        %vm731 = vweird.f32 %v726
        %v732 = vsel %vm731, %v726, %v730
        %v733 = vmul.f32 %v722, %v732
        %v734 = vmul.f32 %v725, %v732
        %v735 = vsub.f32 %v717, %v733
        %v736 = vsub.f32 %v718, %v734
        %v737 = vmul.f32 %v735, %v735
        %v738 = vmul.f32 %v736, %v736
        %v739 = vsel %vm719, %v737, 0.0
        %740 = vadd.xlane.f32.xlu0 %v739
        %v741 = vpop.xlane.xlu0 %740
        %v742 = vsel %vm719, %v738, 0.0
        %743 = vadd.xlane.f32.xlu0 %v742
        %v744 = vpop.xlane.xlu0 %743
        %v745 = vmul.f32 %v741, %v732
        %v746 = vmul.f32 %v744, %v732
        %v747 = vadd.f32 %v745, 1e-05
        %v748 = vadd.f32 %v746, 1e-05
        %v749 = vrsqrt.pop %v747
        %v750 = vmul.f32 %v749, %v747
        %v751 = vmul.f32 %v750, %v749
        %v752 = vmul.f32 0.5, %v751
        %v753 = vsub.f32 1.5, %v752
        %v754 = vmul.f32 %v749, %v753
        %vm755 = vweird.f32 %v747
        %vm756 = vweird.f32 %v749
        %vm757 = vmor %vm755, %vm756
        %v758 = vsel %vm757, %v749, %v754
        %v759 = vrsqrt.pop %v748
        %v760 = vmul.f32 %v759, %v748
        %v761 = vmul.f32 %v760, %v759
        %v762 = vmul.f32 0.5, %v761
        %v763 = vsub.f32 1.5, %v762
        %v764 = vmul.f32 %v759, %v763
        %vm765 = vweird.f32 %v748
        %vm766 = vweird.f32 %v759
        %vm767 = vmor %vm765, %vm766
        %v768 = vsel %vm767, %v759, %v764
        %v769 = vmul.f32 %v735, %v758
        %v770 = vmul.f32 %v736, %v768
        %v771 = vld [vmem:[%s1] sm:$0x1]
        %v773 = vperm.slane %v771, 0
        %v775 = vmul.f32 %v769, %v773
        %v776 = vmul.f32 %v770, %v773
        %v777 = vld [vmem:[%s2] sm:$0x1]
        %v779 = vperm.slane %v777, 0
        %v781 = vadd.f32 %v775, %v779
        %v782 = vadd.f32 %v776, %v779
        %v783 = vpack.c.bf16 %v782, %v781
        %v784 = vld [vmem:[%s3] sm:$0xf]
        %v785 = vld [vmem:[%s3 + $0x4] sm:$0xf]
        %v786 = vld [vmem:[%s3 + $0x8] sm:$0xf]
        %v787 = vld [vmem:[%s3 + $0xc] sm:$0xf]
        %v788 = vld [vmem:[%s6] sm:$0x1]
        %v790 = vperm.slane %v788, 0
        %v796 = vunpack.c.l.b16 %v784
        %v797 = vunpack.c.l.b16 %v785
        %v798 = vunpack.c.l.b16 %v786
        %v799 = vunpack.c.l.b16 %v787
        %v800 = vpack.c.b16 %v797, %v796
        %v801 = vpack.c.b16 %v799, %v798
        %v805 = vsel %vm719, %v783, 0
        %807 = vmatpush.bf16.msra.mxu0 0
        %808 = vmatpush.bf16.msra.mxu0 0
        %809 = vmatpush.bf16.msra.mxu0 0
        %810 = vmatpush.bf16.msra.mxu0 0
        %811 = vmatpush.bf16.msra.mxu0 0
        %812 = vmatpush.bf16.msra.mxu0 0
        %813 = vmatpush.bf16.msra.mxu0 %v801
        %814 = vmatpush.bf16.msra.mxu0 %v800
        %815 = vmatmul.bf16.gmra.mxu0 %v805
        %v816 = vpop.f32.mrf.mxu0
        %v817 = vadd.f32 %v790, %v816
        %v818 = vpop.f32.mrf.mxu0
        %v819 = vadd.f32 %v790, %v818
        %820 = vdwg.mxu0
        %v821 = vld [vmem:[%s4] sm:$0xf]
        %v822 = vld [vmem:[%s4 + $0x4] sm:$0xf]
        %v823 = vld [vmem:[%s4 + $0x8] sm:$0xf]
        %v824 = vld [vmem:[%s4 + $0xc] sm:$0xf]
        %v825 = vld [vmem:[%s7] sm:$0x1]
        %v827 = vperm.slane %v825, 0
        %v833 = vunpack.c.l.b16 %v821
        %v834 = vunpack.c.l.b16 %v822
        %v835 = vunpack.c.l.b16 %v823
        %v836 = vunpack.c.l.b16 %v824
        %v837 = vpack.c.b16 %v834, %v833
        %v838 = vpack.c.b16 %v836, %v835
        %841 = vmatpush.bf16.msra.mxu0 0
        %842 = vmatpush.bf16.msra.mxu0 0
        %843 = vmatpush.bf16.msra.mxu0 0
        %844 = vmatpush.bf16.msra.mxu0 0
        %845 = vmatpush.bf16.msra.mxu0 0
        %846 = vmatpush.bf16.msra.mxu0 0
        %847 = vmatpush.bf16.msra.mxu0 %v838
        %848 = vmatpush.bf16.msra.mxu0 %v837
        %849 = vmatmul.bf16.gmra.mxu0 %v805
        %v850 = vpop.f32.mrf.mxu0
        %v851 = vadd.f32 %v827, %v850
        %v852 = vpop.f32.mrf.mxu0
        %v853 = vadd.f32 %v827, %v852
        %854 = vdwg.mxu0
        %v855 = vld [vmem:[%s5] sm:$0xf]
        %v856 = vld [vmem:[%s5 + $0x4] sm:$0xf]
        %v857 = vld [vmem:[%s5 + $0x8] sm:$0xf]
        %v858 = vld [vmem:[%s5 + $0xc] sm:$0xf]
        %v859 = vld [vmem:[%s8] sm:$0x1]
        %v861 = vperm.slane %v859, 0
        %v867 = vunpack.c.l.b16 %v855
        %v868 = vunpack.c.l.b16 %v856
        %v869 = vunpack.c.l.b16 %v857
        %v870 = vunpack.c.l.b16 %v858
        %v871 = vpack.c.b16 %v868, %v867
        %v872 = vpack.c.b16 %v870, %v869
        %875 = vmatpush.bf16.msra.mxu0 0
        %876 = vmatpush.bf16.msra.mxu0 0
        %877 = vmatpush.bf16.msra.mxu0 0
        %878 = vmatpush.bf16.msra.mxu0 0
        %879 = vmatpush.bf16.msra.mxu0 0
        %880 = vmatpush.bf16.msra.mxu0 0
        %881 = vmatpush.bf16.msra.mxu0 %v872
        %882 = vmatpush.bf16.msra.mxu0 %v871
        %883 = vmatmul.bf16.gmra.mxu0 %v805
        %v884 = vpop.f32.mrf.mxu0
        %v885 = vadd.f32 %v861, %v884
        %v886 = vpop.f32.mrf.mxu0
        %v887 = vadd.f32 %v861, %v886
        %888 = vdwg.mxu0
        %v889 = vmul.f32 %v817, %v817
        %v890 = vmul.f32 %v819, %v819
        %v891 = vmul.f32 %v851, %v851
        %v892 = vmul.f32 %v853, %v853
        %vm893 = vcmask 130048
        %v894 = vsel %vm893, %v889, 0.0
        %895 = vadd.xlane.f32.xlu0 %v894
        %v896 = vpop.xlane.xlu0 %895
        %v897 = vsel %vm893, %v890, 0.0
        %898 = vadd.xlane.f32.xlu0 %v897
        %v899 = vpop.xlane.xlu0 %898
        %v900 = vsel %vm893, %v891, 0.0
        %901 = vadd.xlane.f32.xlu0 %v900
        %v902 = vpop.xlane.xlu0 %901
        %v903 = vsel %vm893, %v892, 0.0
        %904 = vadd.xlane.f32.xlu0 %v903
        %v905 = vpop.xlane.xlu0 %904
        %v906 = vmul.f32 %v896, 0.5
        %v907 = vmul.f32 %v899, 0.5
        %v908 = vmul.f32 %v902, 0.5
        %v909 = vmul.f32 %v905, 0.5
        %v910 = vpack.c.bf16 %v819, %v817
        %v911 = vpack.c.bf16 %v853, %v851
        %v912 = vld [vmem:[%s9] sm:$0xf]
        %v913 = vld [vmem:[%s9 + $0x4] sm:$0xf]
        %v916 = vunpack.c.l.b16 %v912
        %v917 = vunpack.c.l.b16 %v913
        %v918 = vpack.c.b16 %v917, %v916
        %v921 = vsel %vm893, %v910, 0
        %v924 = vsel %vm893, %v911, 0
        %926 = vmatpush.bf16.msra.mxu0 0
        %927 = vmatpush.bf16.msra.mxu0 0
        %928 = vmatpush.bf16.msra.mxu0 0
        %929 = vmatpush.bf16.msra.mxu0 0
        %930 = vmatpush.bf16.msra.mxu0 0
        %931 = vmatpush.bf16.msra.mxu0 0
        %932 = vmatpush.bf16.msra.mxu0 0
        %933 = vmatpush.bf16.msra.mxu0 %v918
        %934 = vmatmul.bf16.gmra.mxu0 %v921
        %v935 = vpop.f32.mrf.mxu0
        %v936 = vadd.f32 0.0, %v935
        %v937 = vpop.f32.mrf.mxu0
        %v938 = vadd.f32 0.0, %v937
        %939 = vmatmul.bf16.gmra.mxu0 %v924
        %v940 = vpop.f32.mrf.mxu0
        %v941 = vadd.f32 0.0, %v940
        %v942 = vpop.f32.mrf.mxu0
        %v943 = vadd.f32 0.0, %v942
        %944 = vdwg.mxu0
        %v945 = vsub.f32 %v936, %v906
        %v946 = vsub.f32 %v938, %v907
        %v947 = vsub.f32 %v941, %v908
        %v948 = vsub.f32 %v943, %v909
        %v949 = vmul.f32 %v945, 1.442695
        %v950 = vpow.pop %v949
        %v951 = vmul.f32 %v946, 1.442695
        %v952 = vpow.pop %v951
        %v953 = vmul.f32 %v947, 1.442695
        %v954 = vpow.pop %v953
        %v955 = vmul.f32 %v948, 1.442695
        %v956 = vpow.pop %v955
        %v957 = vmul.f32 %v950, 0.35355338
        %v958 = vmul.f32 %v952, 0.35355338
        %v959 = vmul.f32 %v954, 0.35355338
        %v960 = vmul.f32 %v956, 0.35355338
        %vm961 = vcmask 64512
        %v962 = vsel %vm961, %v957, 0.0
        %v963 = vsel %vm961, %v958, 0.0
        %v964 = vadd.f32 %v962, %v963
        %v965 = vrot.slane %v964, 4
        %v966 = vadd.f32 %v964, %v965
        %v967 = vrot.slane %v966, 2
        %v968 = vadd.f32 %v966, %v967
        %v969 = vrot.slane %v968, 1
        %v970 = vadd.f32 %v968, %v969
        %v971 = vmul.f32 %v959, %v970
        %v972 = vmul.f32 %v960, %v970
        %v973 = vsel %vm961, %v971, 0.0
        %974 = vadd.xlane.f32.xlu0 %v973
        %v975 = vpop.xlane.xlu0 %974
        %v976 = vsel %vm961, %v972, 0.0
        %977 = vadd.xlane.f32.xlu0 %v976
        %v978 = vpop.xlane.xlu0 %977
        %v979 = vpack.c.bf16 %v957, %v957
        %v980 = vpack.c.bf16 %v958, %v958
        %v981 = vpack.c.bf16 %v959, %v959
        %v982 = vpack.c.bf16 %v960, %v960
        %v983 = vpack.c.bf16 %v885, %v885
        %v984 = vpack.c.bf16 %v887, %v887
        %v987 = vunpack.c.l.b16 %v979
        %v988 = vunpack.c.l.b16 %v980
        %v989 = vpack.c.b16 %v988, %v987
        %991 = vxpose.xlu0.c.b16.start [1/8] %v989, 128
        %992 = vxpose.xlu0.c.b16.cont [2/8] 0, 128
        %993 = vxpose.xlu0.c.b16.cont [3/8] 0, 128
        %994 = vxpose.xlu0.c.b16.cont [4/8] 0, 128
        %995 = vxpose.xlu0.c.b16.cont [5/8] 0, 128
        %996 = vxpose.xlu0.c.b16.cont [6/8] 0, 128
        %997 = vxpose.xlu0.c.b16.cont [7/8] 0, 128
        %998 = vxpose.xlu0.c.b16.end [8/8] 0, 128
        %v999 = vpop.trf.xlu0
        %v1000 = vpop.trf.xlu0
        %v1001 = vpop.trf.xlu0
        %v1002 = vpop.trf.xlu0
        %v1003 = vpop.trf.xlu0
        %v1004 = vpop.trf.xlu0
        %v1005 = vpop.trf.xlu0
        %v1006 = vpop.trf.xlu0
        %v1009 = vunpack.c.l.b16 %v983
        %v1010 = vunpack.c.l.b16 %v984
        %v1011 = vpack.c.b16 %v1010, %v1009
        %v1014 = vsel %vm893, %v999, 0
        %1016 = vmatpush.bf16.msra.mxu0 0
        %1017 = vmatpush.bf16.msra.mxu0 0
        %1018 = vmatpush.bf16.msra.mxu0 0
        %1019 = vmatpush.bf16.msra.mxu0 0
        %1020 = vmatpush.bf16.msra.mxu0 0
        %1021 = vmatpush.bf16.msra.mxu0 0
        %1022 = vmatpush.bf16.msra.mxu0 0
        %1023 = vmatpush.bf16.msra.mxu0 %v1011
        %1024 = vmatmul.bf16.gmra.mxu0 %v1014
        %v1025 = vpop.f32.mrf.mxu0
        %v1026 = vadd.f32 0.0, %v1025
        %v1027 = vpop.f32.mrf.mxu0
        %1028 = vdwg.mxu0
        %v1029 = vpack.c.bf16 %v1026, %v1026
        %v1032 = vunpack.c.l.b16 %v981
        %v1033 = vunpack.c.l.b16 %v982
        %v1034 = vpack.c.b16 %v1033, %v1032
        %v1036 = vsel %vm961, %v1034, 0
        %vm1038 = vcmask 1043456
        %v1040 = vsel %vm1038, %v1029, 0
        %1042 = vmatpush.bf16.msra.mxu0 0
        %1043 = vmatpush.bf16.msra.mxu0 0
        %1044 = vmatpush.bf16.msra.mxu0 0
        %1045 = vmatpush.bf16.msra.mxu0 0
        %1046 = vmatpush.bf16.msra.mxu0 0
        %1047 = vmatpush.bf16.msra.mxu0 0
        %1048 = vmatpush.bf16.msra.mxu0 0
        %1049 = vmatpush.bf16.msra.mxu0 %v1040
        %1050 = vmatmul.bf16.gmra.mxu0 %v1036
        %v1051 = vpop.f32.mrf.mxu0
        %v1052 = vadd.f32 0.0, %v1051
        %v1053 = vpop.f32.mrf.mxu0
        %v1054 = vadd.f32 0.0, %v1053
        %1055 = vdwg.mxu0
        %v1056 = vadd.f32 %v975, 1e-08
        %v1057 = vadd.f32 %v978, 1e-08
        %v1058 = vrcp.pop %v1056
        %v1059 = vrcp.pop %v1057
        %v1060 = vmul.f32 %v1052, %v1058
        %v1061 = vmul.f32 %v1054, %v1059
        %v1062 = vpack.c.bf16 %v1061, %v1060
        %v1063 = vld [vmem:[%s10] sm:$0xf]
        %v1064 = vld [vmem:[%s10 + $0x4] sm:$0xf]
        %v1065 = vld [vmem:[#allocation3] sm:$0x1]
        %v1067 = vperm.slane %v1065, 0
        %v1071 = vunpack.c.l.b16 %v1063
        %v1072 = vunpack.c.l.b16 %v1064
        %v1073 = vpack.c.b16 %v1072, %v1071
        %v1076 = vsel %vm893, %v1062, 0
        %1078 = vmatpush.bf16.msra.mxu0 0
        %1079 = vmatpush.bf16.msra.mxu0 0
        %1080 = vmatpush.bf16.msra.mxu0 0
        %1081 = vmatpush.bf16.msra.mxu0 0
        %1082 = vmatpush.bf16.msra.mxu0 0
        %1083 = vmatpush.bf16.msra.mxu0 0
        %1084 = vmatpush.bf16.msra.mxu0 0
        %1085 = vmatpush.bf16.msra.mxu0 %v1073
        %1086 = vmatmul.bf16.gmra.mxu0 %v1076
        %v1087 = vpop.f32.mrf.mxu0
        %v1088 = vadd.f32 %v1067, %v1087
        %v1089 = vpop.f32.mrf.mxu0
        %v1090 = vadd.f32 %v1067, %v1089
        %1091 = vdwg.mxu0
        %v1092 = vadd.f32 %v885, %v1088
        %v1093 = vadd.f32 %v887, %v1090
        %v1094 = vpack.c.bf16 %v1093, %v1092
        %v1095 = vld [vmem:[#allocation6] sm:$0xf]
        %v1096 = vld [vmem:[#allocation6 + $0x4] sm:$0xf]
        %v1099 = vunpack.c.l.b16 %v1095
        %v1100 = vunpack.c.l.b16 %v1096
        %v1101 = vpack.c.b16 %v1100, %v1099
        %v1104 = vsel %vm893, %v1094, 0
        %1106 = vmatpush.bf16.msra.mxu0 0
        %1107 = vmatpush.bf16.msra.mxu0 0
        %1108 = vmatpush.bf16.msra.mxu0 0
        %1109 = vmatpush.bf16.msra.mxu0 0
        %1110 = vmatpush.bf16.msra.mxu0 0
        %1111 = vmatpush.bf16.msra.mxu0 0
        %1112 = vmatpush.bf16.msra.mxu0 0
        %1113 = vmatpush.bf16.msra.mxu0 %v1101
        %1114 = vmatmul.bf16.gmra.mxu0 %v1104
        %v1115 = vpop.f32.mrf.mxu0
        %v1116 = vadd.f32 0.0, %v1115
        %v1117 = vpop.f32.mrf.mxu0
        %v1118 = vadd.f32 0.0, %v1117
        %1119 = vdwg.mxu0
        %v1120 = vld [vmem:[#allocation8] sm:$0x1]
        %v1122 = vperm.slane %v1120, 0
        %v1124 = vmul.f32 %v1116, %v1122
        %v1125 = vmul.f32 %v1118, %v1122
        %v1126 = vld [vmem:[#allocation9] sm:$0x1]
        %v1128 = vperm.slane %v1126, 0
        %v1130 = vadd.f32 %v1124, %v1128
        %v1131 = vadd.f32 %v1125, %v1128
        %v1132 = vadd.f32 %v1130, 3.0
        %v1133 = vadd.f32 %v1131, 3.0
        %v1134 = vmax.f32 %v1132, 0.0
        %v1135 = vmax.f32 %v1133, 0.0
        %v1136 = vmin.f32 %v1134, 6.0
        %v1137 = vmin.f32 %v1135, 6.0
        %v1138 = vmul.f32 %v1130, %v1136
        %v1139 = vmul.f32 %v1131, %v1137
        %v1140 = vmul.f32 %v1138, 0.16666667
        %v1141 = vmul.f32 %v1139, 0.16666667
        %vm1142 = vcmask 128000
        %1143 = vst.msk [vmem:[#allocation2] sm:$0x3f] %vm1142, 0.0
        %1144 = vst.msk [vmem:[#allocation2 + $0x8] sm:$0x3f] %vm1142, 0.0
        %1145 = vst.msk [vmem:[#allocation2 + $0x10] sm:$0x3f] %vm1142, 0.0
        %1146 = vst.msk [vmem:[#allocation2 + $0x18] sm:$0x3f] %vm1142, 0.0
        %1147 = vst.msk [vmem:[#allocation2 + $0x20] sm:$0x3f] %vm1142, 0.0
        %1148 = vst.msk [vmem:[#allocation2 + $0x28] sm:$0x3f] %vm1142, 0.0
        %v1151 = vrot.slane %v1140, 4
        %v1152 = vrot.slane %v1141, 4
        %s1155 = scalar_lea.vmem [#allocation2], 8
        %vm1156 = vcmask 125952
        %1157 = vst.msk [vmem:[%s1155 + $0x1] sm:$0xf] %vm1156, %v1140
        %1158 = vst.msk [vmem:[%s1155 + $0x9] sm:$0xf] %vm1156, %v1151
        %1159 = vst.msk [vmem:[%s1155 + $0x11] sm:$0xf] %vm1156, %v1141
        %1160 = vst.msk [vmem:[%s1155 + $0x19] sm:$0xf] %vm1156, %v1152
        %v1161 = vld [vmem:[#allocation2] sm:$0xf]
        %v1162 = vld [vmem:[#allocation2 + $0x8] sm:$0xf]
        %v1163 = vld [vmem:[#allocation2 + $0x10] sm:$0xf]
        %v1164 = vld [vmem:[#allocation2 + $0x18] sm:$0xf]
        %v1165 = vld [vmem:[%s15] sm:$0x1]
        %v1166 = vperm.slane %v1165, 0
        %v1167 = vmul.f32 %v1161, %v1166
        %v1168 = vmul.f32 %v1162, %v1166
        %v1169 = vmul.f32 %v1163, %v1166
        %v1170 = vmul.f32 %v1164, %v1166
        %v1171 = vadd.f32 %v1167, 0.0
        %v1172 = vadd.f32 %v1168, 0.0
        %v1173 = vadd.f32 %v1169, 0.0
        %v1174 = vadd.f32 %v1170, 0.0
        %v1175 = vld [vmem:[#allocation2 + $0x1] sm:$0xf]
        %v1176 = vld [vmem:[#allocation2 + $0x9] sm:$0xf]
        %v1177 = vld [vmem:[#allocation2 + $0x11] sm:$0xf]
        %v1178 = vld [vmem:[#allocation2 + $0x19] sm:$0xf]
        %v1179 = vld [vmem:[%s15 + $0x1] sm:$0x1]
        %v1180 = vperm.slane %v1179, 0
        %v1181 = vmul.f32 %v1175, %v1180
        %v1182 = vmul.f32 %v1176, %v1180
        %v1183 = vmul.f32 %v1177, %v1180
        %v1184 = vmul.f32 %v1178, %v1180
        %v1185 = vadd.f32 %v1171, %v1181
        %v1186 = vadd.f32 %v1172, %v1182
        %v1187 = vadd.f32 %v1173, %v1183
        %v1188 = vadd.f32 %v1174, %v1184
        %v1189 = vld [vmem:[#allocation2 + $0x2] sm:$0xf]
        %v1190 = vld [vmem:[#allocation2 + $0xa] sm:$0xf]
        %v1191 = vld [vmem:[#allocation2 + $0x12] sm:$0xf]
        %v1192 = vld [vmem:[#allocation2 + $0x1a] sm:$0xf]
        %v1193 = vld [vmem:[%s15 + $0x2] sm:$0x1]
        %v1194 = vperm.slane %v1193, 0
        %v1195 = vmul.f32 %v1189, %v1194
        %v1196 = vmul.f32 %v1190, %v1194
        %v1197 = vmul.f32 %v1191, %v1194
        %v1198 = vmul.f32 %v1192, %v1194
        %v1199 = vadd.f32 %v1185, %v1195
        %v1200 = vadd.f32 %v1186, %v1196
        %v1201 = vadd.f32 %v1187, %v1197
        %v1202 = vadd.f32 %v1188, %v1198
        %v1203 = vld [vmem:[%s1155] sm:$0xf]
        %v1204 = vld [vmem:[%s1155 + $0x8] sm:$0xf]
        %v1205 = vld [vmem:[%s1155 + $0x10] sm:$0xf]
        %v1206 = vld [vmem:[%s1155 + $0x18] sm:$0xf]
        %v1207 = vld [vmem:[%s15 + $0x3] sm:$0x1]
        %v1208 = vperm.slane %v1207, 0
        %v1209 = vmul.f32 %v1203, %v1208
        %v1210 = vmul.f32 %v1204, %v1208
        %v1211 = vmul.f32 %v1205, %v1208
        %v1212 = vmul.f32 %v1206, %v1208
        %v1213 = vadd.f32 %v1199, %v1209
        %v1214 = vadd.f32 %v1200, %v1210
        %v1215 = vadd.f32 %v1201, %v1211
        %v1216 = vadd.f32 %v1202, %v1212
        %v1217 = vld [vmem:[%s1155 + $0x1] sm:$0xf]
        %v1218 = vld [vmem:[%s1155 + $0x9] sm:$0xf]
        %v1219 = vld [vmem:[%s1155 + $0x11] sm:$0xf]
        %v1220 = vld [vmem:[%s1155 + $0x19] sm:$0xf]
        %v1221 = vld [vmem:[%s15 + $0x4] sm:$0x1]
        %v1222 = vperm.slane %v1221, 0
        %v1223 = vmul.f32 %v1217, %v1222
        %v1224 = vmul.f32 %v1218, %v1222
        %v1225 = vmul.f32 %v1219, %v1222
        %v1226 = vmul.f32 %v1220, %v1222
        %v1227 = vadd.f32 %v1213, %v1223
        %v1228 = vadd.f32 %v1214, %v1224
        %v1229 = vadd.f32 %v1215, %v1225
        %v1230 = vadd.f32 %v1216, %v1226
        %v1231 = vld [vmem:[%s1155 + $0x2] sm:$0xf]
        %v1232 = vld [vmem:[%s1155 + $0xa] sm:$0xf]
        %v1233 = vld [vmem:[%s1155 + $0x12] sm:$0xf]
        %v1234 = vld [vmem:[%s1155 + $0x1a] sm:$0xf]
        %v1235 = vld [vmem:[%s15 + $0x5] sm:$0x1]
        %v1236 = vperm.slane %v1235, 0
        %v1237 = vmul.f32 %v1231, %v1236
        %v1238 = vmul.f32 %v1232, %v1236
        %v1239 = vmul.f32 %v1233, %v1236
        %v1240 = vmul.f32 %v1234, %v1236
        %v1241 = vadd.f32 %v1227, %v1237
        %v1242 = vadd.f32 %v1228, %v1238
        %v1243 = vadd.f32 %v1229, %v1239
        %v1244 = vadd.f32 %v1230, %v1240
        %s1245 = scalar_lea.vmem [#allocation2], 16
        %v1246 = vld [vmem:[%s1245] sm:$0xf]
        %v1247 = vld [vmem:[%s1245 + $0x8] sm:$0xf]
        %v1248 = vld [vmem:[%s1245 + $0x10] sm:$0xf]
        %v1249 = vld [vmem:[%s1245 + $0x18] sm:$0xf]
        %v1250 = vld [vmem:[%s15 + $0x6] sm:$0x1]
        %v1251 = vperm.slane %v1250, 0
        %v1252 = vmul.f32 %v1246, %v1251
        %v1253 = vmul.f32 %v1247, %v1251
        %v1254 = vmul.f32 %v1248, %v1251
        %v1255 = vmul.f32 %v1249, %v1251
        %v1256 = vadd.f32 %v1241, %v1252
        %v1257 = vadd.f32 %v1242, %v1253
        %v1258 = vadd.f32 %v1243, %v1254
        %v1259 = vadd.f32 %v1244, %v1255
        %v1260 = vld [vmem:[%s1245 + $0x1] sm:$0xf]
        %v1261 = vld [vmem:[%s1245 + $0x9] sm:$0xf]
        %v1262 = vld [vmem:[%s1245 + $0x11] sm:$0xf]
        %v1263 = vld [vmem:[%s1245 + $0x19] sm:$0xf]
        %v1264 = vld [vmem:[%s15 + $0x7] sm:$0x1]
        %v1265 = vperm.slane %v1264, 0
        %v1266 = vmul.f32 %v1260, %v1265
        %v1267 = vmul.f32 %v1261, %v1265
        %v1268 = vmul.f32 %v1262, %v1265
        %v1269 = vmul.f32 %v1263, %v1265
        %v1270 = vadd.f32 %v1256, %v1266
        %v1271 = vadd.f32 %v1257, %v1267
        %v1272 = vadd.f32 %v1258, %v1268
        %v1273 = vadd.f32 %v1259, %v1269
        %v1274 = vld [vmem:[%s1245 + $0x2] sm:$0xf]
        %v1275 = vld [vmem:[%s1245 + $0xa] sm:$0xf]
        %v1276 = vld [vmem:[%s1245 + $0x12] sm:$0xf]
        %v1277 = vld [vmem:[%s1245 + $0x1a] sm:$0xf]
        %v1278 = vld [vmem:[%s15 + $0x8] sm:$0x1]
        %v1279 = vperm.slane %v1278, 0
        %v1280 = vmul.f32 %v1274, %v1279
        %v1281 = vmul.f32 %v1275, %v1279
        %v1282 = vmul.f32 %v1276, %v1279
        %v1283 = vmul.f32 %v1277, %v1279
        %v1284 = vadd.f32 %v1270, %v1280
        %v1285 = vadd.f32 %v1271, %v1281
        %v1286 = vadd.f32 %v1272, %v1282
        %v1287 = vadd.f32 %v1273, %v1283
        %v1288 = vld [vmem:[%s16] sm:$0x1]
        %v1290 = vperm.slane %v1288, 0
        %v1292 = vrot.slane %v1290, 4
        %v1294 = vmul.f32 %v1284, %v1290
        %v1295 = vmul.f32 %v1285, %v1292
        %v1296 = vmul.f32 %v1286, %v1290
        %v1297 = vmul.f32 %v1287, %v1292
        %v1298 = vld [vmem:[%s17] sm:$0x1]
        %v1300 = vperm.slane %v1298, 0
        %v1302 = vrot.slane %v1300, 4
        %v1304 = vadd.f32 %v1294, %v1300
        %v1305 = vadd.f32 %v1295, %v1302
        %v1306 = vadd.f32 %v1296, %v1300
        %v1307 = vadd.f32 %v1297, %v1302
        %v1308 = vadd.f32 %v1304, 3.0
        %v1309 = vadd.f32 %v1305, 3.0
        %v1310 = vadd.f32 %v1306, 3.0
        %v1311 = vadd.f32 %v1307, 3.0
        %v1312 = vmax.f32 %v1308, 0.0
        %v1313 = vmax.f32 %v1309, 0.0
        %v1314 = vmax.f32 %v1310, 0.0
        %v1315 = vmax.f32 %v1311, 0.0
        %v1316 = vmin.f32 %v1312, 6.0
        %v1317 = vmin.f32 %v1313, 6.0
        %v1318 = vmin.f32 %v1314, 6.0
        %v1319 = vmin.f32 %v1315, 6.0
        %v1320 = vmul.f32 %v1304, %v1316
        %v1321 = vmul.f32 %v1305, %v1317
        %v1322 = vmul.f32 %v1306, %v1318
        %v1323 = vmul.f32 %v1307, %v1319
        %v1324 = vmul.f32 %v1320, 0.16666667
        %v1325 = vmul.f32 %v1321, 0.16666667
        %v1326 = vmul.f32 %v1322, 0.16666667
        %v1327 = vmul.f32 %v1323, 0.16666667
        %1332 = vst [vmem:[#allocation1] ss:$2 sm:$0xff] %v1324
        %s1333 = scalar_lea.vmem [#allocation1], 1
        %1334 = vst [vmem:[%s1333] ss:$2 sm:$0xff] %v1325
        %s1335 = scalar_lea.vmem [#allocation1], 16
        %1336 = vst [vmem:[%s1335] ss:$2 sm:$0xff] %v1326
        %s1337 = scalar_lea.vmem [#allocation1], 17
        %1338 = vst [vmem:[%s1337] ss:$2 sm:$0xff] %v1327
        %v1339 = vld.sshfl [vmem:[#allocation1] sm:$0xff pattern:$0x75316420]
        %v1340 = vld.sshfl [vmem:[#allocation1 + $0x10] sm:$0xff pattern:$0x75316420]
        %v1343 = vpack.c.bf16 %v1340, %v1339
        %v1344 = vld [vmem:[%s18] sm:$0xf]
        %v1345 = vld [vmem:[%s18 + $0x4] sm:$0xf]
        %v1348 = vunpack.c.l.b16 %v1344
        %v1349 = vunpack.c.l.b16 %v1345
        %v1350 = vpack.c.b16 %v1349, %v1348
        %v1353 = vsel %vm893, %v1343, 0
        %1355 = vmatpush.bf16.msra.mxu0 0
        %1356 = vmatpush.bf16.msra.mxu0 0
        %1357 = vmatpush.bf16.msra.mxu0 0
        %1358 = vmatpush.bf16.msra.mxu0 0
        %1359 = vmatpush.bf16.msra.mxu0 0
        %1360 = vmatpush.bf16.msra.mxu0 0
        %1361 = vmatpush.bf16.msra.mxu0 0
        %1362 = vmatpush.bf16.msra.mxu0 %v1350
        %1363 = vmatmul.bf16.gmra.mxu0 %v1353
        %v1364 = vpop.f32.mrf.mxu0
        %v1365 = vadd.f32 0.0, %v1364
        %v1366 = vpop.f32.mrf.mxu0
        %v1367 = vadd.f32 0.0, %v1366
        %1368 = vdwg.mxu0
        %v1369 = vld [vmem:[%s19] sm:$0x1]
        %v1371 = vperm.slane %v1369, 0
        %v1373 = vmul.f32 %v1365, %v1371
        %v1374 = vmul.f32 %v1367, %v1371
        %v1375 = vld [vmem:[%s20] sm:$0x1]
        %v1377 = vperm.slane %v1375, 0
        %v1379 = vadd.f32 %v1373, %v1377
        %v1380 = vadd.f32 %v1374, %v1377
        %v1381 = vadd.f32 %v1092, %v1379
        %v1382 = vadd.f32 %v1093, %v1380
        %1383 = vst.msk [vmem:[%s710] sm:$0xff] %vm893, %v1381
        %1384 = vst.msk [vmem:[%s710 + $0x8] sm:$0xff] %vm893, %v1382
        %s1385 = sand.u32 %s492, 1
        %s1386 = scalar_lea.sflag [#allocation5], %s1385
        %s1387 = sand.u32 %s492, 1
        %s1388 = smul.addr %s1387, 16
        %s1389 = scalar_lea.vmem [#allocation11], %s1388
        // Predicated region
        $region121: #{tpu_custom_call.1} parent=103 // pred_check
          %p1390 = pneg %p502
        $region122: #{tpu_custom_call.1} parent=103 // pred_check_branch
          %1392 = sbr.rel (%p1390) target = $region124
        $region123: #{tpu_custom_call.1} parent=103 // pred_region
          %1394 = vsyncadd %s1386, 0
          %s1395 = smul.addr %s38, 2
          %s1396 = smul.addr %s1395, 8
          %s1397 = scalar_lea.hbm %s21, %s1396
          %s1398 = sshll.u32 %s1389, 4
          %s1399 = int_to_ptr.vmem [resolvable:$true] %s1398
          %s1400 = sshll.u32 %s1397, 4
          %s1401 = int_to_ptr.hbm [resolvable:$true] %s1400
          %1406 = dma.vmem_to_hbm [thread:$0]  %s1399, 256, %s1401, %s1386, 128, 128, 8
        $region124: #{tpu_custom_call.1} parent=103 // pred_fallthru
          _
      $region104: #{tpu_custom_call.1} parent=5 // pred_fallthru
        _
      %p1407 = scmp.le.s32.totalorder 2, %s33
      // Predicated region
      $region125: #{tpu_custom_call.1} parent=5 // pred_check
        %p1408 = pneg %p1407
      $region126: #{tpu_custom_call.1} parent=5 // pred_check_branch
        %1410 = sbr.rel (%p1408) target = $region128
      $region127: #{tpu_custom_call.1} parent=5 // pred_region
        %s1411 = ssub.s32 %s33, 2
        // Predicated region
        $region129: #{tpu_custom_call.1} parent=127 // pred_check
          %p1412 = pneg %p508
        $region130: #{tpu_custom_call.1} parent=127 // pred_check_branch
          %1414 = sbr.rel (%p1412) target = $region132
        $region131: #{tpu_custom_call.1} parent=127 // pred_region
          %s1415 = sand.u32 %s493, 1
          %s1416 = scalar_lea.sflag [#allocation5], %s1415
          %s1417 = sand.u32 %s493, 1
          %s1418 = smul.addr %s1417, 16
          %s1419 = scalar_lea.vmem [#allocation11], %s1418
          %1421 = dma.done %s1416, 256
        $region132: #{tpu_custom_call.1} parent=127 // pred_fallthru
          _
      $region128: #{tpu_custom_call.1} parent=5 // pred_fallthru
        _
    $region6: #{tpu_custom_call.1} parent=1 // loop_footer
      %s37 = sadd.s32 1, %s33
    $region7: #{tpu_custom_call.1} parent=1 // loop_footer_branch
      %32 = sbr.rel target = $region3
    $region8: #{tpu_custom_call.1} parent=1 // loop_exit
      _
    %1422 = vsyncpa [#allocation4], 1
    %s1423 = scalar_lea.sflag [#allocation4], 1
    %1424 = vsyncpa %s1423, 1
    %1425 = vsyncpa [#allocation7], 1
    %1426 = vsyncpa [#allocation10], 1
    %1427 = vsyncpa [#allocation5], 1
    %s1428 = scalar_lea.sflag [#allocation5], 1
    %1429 = vsyncpa %s1428, 1

</llo_original>
